<compile_context>
chip_gen: v5e
topology: v5e:2x2
jax: 0.10.0
libtpu: 0.0.40
codegen_flags: <defaults>
</compile_context>

<pallas_src>
import functools
import numpy as np
import jax
import jax.numpy as jnp
from jax import lax
from jax.experimental import pallas as pl
from jax.experimental.pallas import tpu as pltpu

PAD = 0
LN_EPS = 1e-5
NEG_BIG = -1e30   # finite stand-in for masked_fill(-inf); pad rows are zeroed anyway


# ---------------------------------------------------------------------------
# Pallas kernel: full encoder stack (all layers) + final projection
# ---------------------------------------------------------------------------
def encoder_stack_kernel(x_ref, npm_ref, bias_ref,
                         wqkv_ref, bqkv_ref, fcw_ref, fcb_ref,
                         ln1g_ref, ln1b_ref, w1_ref, b1_ref, w2_ref, b2_ref,
                         ln2g_ref, ln2b_ref, pw_ref, pb_ref,
                         out_ref, x_res,
                         *, bt, seq_len, n_head, d_k, d_v, mm_dtype):
    layer = pl.program_id(1)
    n_layers = pl.num_programs(1)
    rows = bt * seq_len
    nqk = n_head * d_k
    nv = n_head * d_v

    # layer 0 of each batch tile: load embeddings into the resident activation
    @pl.when(layer == 0)
    def _():
        x_res[...] = x_ref[...]

    x = x_res[...]                       # (rows, D)   float32
    npm = npm_ref[...]                   # (rows, 1)   1.0 where token is NOT pad
    bias = bias_ref[...]                 # (bt, 1, L)  -1e30 where key IS pad

    # ---- fused QKV projection: one big MXU matmul --------------------------
    qkv = (jnp.dot(x.astype(mm_dtype), wqkv_ref[0],
                   preferred_element_type=jnp.float32) + bqkv_ref[0])
    q = qkv[:, :nqk].reshape(bt, seq_len, nqk).astype(mm_dtype)
    k = qkv[:, nqk:2 * nqk].reshape(bt, seq_len, nqk).astype(mm_dtype)
    v = qkv[:, 2 * nqk:2 * nqk + nv].reshape(bt, seq_len, nv).astype(mm_dtype)

    inv_temp = jnp.float32(float(d_k) ** -0.5)

    # only the tiny (L, L) score part needs per-head / per-sequence handling
    ctx_heads = []
    for h in range(n_head):
        qh = q[:, :, h * d_k:(h + 1) * d_k]
        kh = k[:, :, h * d_k:(h + 1) * d_k]
        vh = v[:, :, h * d_v:(h + 1) * d_v]
        s = jnp.einsum("bqd,bkd->bqk", qh, kh,
                       preferred_element_type=jnp.float32) * inv_temp + bias
        s = s - jnp.max(s, axis=-1, keepdims=True)
        p = jnp.exp(s)
        p = p * pl.reciprocal(jnp.sum(p, axis=-1, keepdims=True), approx=True)
        ctx_heads.append(jnp.einsum("bqk,bkd->bqd", p.astype(mm_dtype), vh,
                                    preferred_element_type=jnp.float32))
    heads = jnp.concatenate(ctx_heads, axis=-1).reshape(rows, nv)

    # single fc over concatenated heads
    mha = (jnp.dot(heads.astype(mm_dtype), fcw_ref[0],
                   preferred_element_type=jnp.float32) + fcb_ref[0])

    # ---- residual + LayerNorm 1 + non-pad mask -----------------------------
    y = mha + x
    mu = jnp.mean(y, axis=-1, keepdims=True)
    yc = y - mu
    var = jnp.mean(yc * yc, axis=-1, keepdims=True)
    y = (yc * lax.rsqrt(var + LN_EPS)) * ln1g_ref[0] + ln1b_ref[0]
    y = y * npm

    # ---- position-wise feed forward (1x1 conv == dense) --------------------
    h1 = jnp.maximum(jnp.dot(y.astype(mm_dtype), w1_ref[0],
                             preferred_element_type=jnp.float32) + b1_ref[0], 0.0)
    h2 = jnp.dot(h1.astype(mm_dtype), w2_ref[0],
                 preferred_element_type=jnp.float32) + b2_ref[0]

    # ---- residual + LayerNorm 2 + non-pad mask -----------------------------
    z = h2 + y
    mu = jnp.mean(z, axis=-1, keepdims=True)
    zc = z - mu
    var = jnp.mean(zc * zc, axis=-1, keepdims=True)
    z = (zc * lax.rsqrt(var + LN_EPS)) * ln2g_ref[0] + ln2b_ref[0]
    z = z * npm

    x_res[...] = z

    # ---- last layer: fused final projection (lane-dense padded output) -----
    @pl.when(layer == n_layers - 1)
    def _():
        out_ref[...] = (jnp.dot(z.astype(mm_dtype), pw_ref[...],
                                preferred_element_type=jnp.float32)
                        + pb_ref[...])


# ---------------------------------------------------------------------------
# Wrapper
# ---------------------------------------------------------------------------
def _matmul_dtype():
    """bf16 MXU operands on v6e/v7x; keep f32 operands on v5e / unknown."""
    try:
        kind = jax.devices()[0].device_kind.lower()
    except Exception:
        return jnp.float32
    if any(tag in kind for tag in ("v6", "v7", "7x")):
        return jnp.bfloat16
    return jnp.float32


def _pick_batch_tile(batch, seq_len, target_rows=128):
    """Smallest batch tile whose row count fills an MXU pass; if impossible,
    use the whole batch. More grid steps on the parallel axis helps v7x."""
    for bt in range(1, batch + 1):
        if batch % bt == 0 and bt * seq_len >= target_rows:
            return bt
    return batch


def run_encoder_stack(x_flat, npm_flat, key_bias, stacked, proj_w, proj_b,
                      batch, seq_len, n_head, d_k, d_v, mm_dtype):
    rows_total, d_model = x_flat.shape
    n_layers = stacked[0].shape[0]
    h_pad = proj_w.shape[1]
    bt = _pick_batch_tile(batch, seq_len)
    num_bt = batch // bt
    rows = bt * seq_len

    weight_specs = [pl.BlockSpec((1,) + w.shape[1:], lambda b, l: (l, 0, 0))
                    for w in stacked]
    in_specs = ([pl.BlockSpec((rows, d_model), lambda b, l: (b, 0)),       # x
                 pl.BlockSpec((rows, 1), lambda b, l: (b, 0)),             # non-pad
                 pl.BlockSpec((bt, 1, seq_len), lambda b, l: (b, 0, 0))]   # key bias
                + weight_specs
                + [pl.BlockSpec(proj_w.shape, lambda b, l: (0, 0)),
                   pl.BlockSpec(proj_b.shape, lambda b, l: (0, 0))])

    kernel = functools.partial(encoder_stack_kernel, bt=bt, seq_len=seq_len,
                               n_head=n_head, d_k=d_k, d_v=d_v,
                               mm_dtype=mm_dtype)

    return pl.pallas_call(
        kernel,
        out_shape=jax.ShapeDtypeStruct((rows_total, h_pad), jnp.float32),
        grid_spec=pltpu.PrefetchScalarGridSpec(
            num_scalar_prefetch=0,
            grid=(num_bt, n_layers),
            in_specs=in_specs,
            out_specs=pl.BlockSpec((rows, h_pad), lambda b, l: (b, 0)),
            scratch_shapes=[pltpu.VMEM((rows, d_model), jnp.float32)],
        ),
        compiler_params=pltpu.CompilerParams(
            dimension_semantics=("parallel", "arbitrary"),
            vmem_limit_bytes=48 * 1024 * 1024,   # fits v7x's 64 MiB VMEM
        ),
    )(x_flat, npm_flat, key_bias, *stacked, proj_w, proj_b)


# ---------------------------------------------------------------------------
# Parameters / glue
# ---------------------------------------------------------------------------
def sinusoid_table(n_position, d_hid, padding_idx=0):
    pos = np.arange(n_position)[:, None].astype(np.float64)
    idx = np.arange(d_hid)[None, :]
    angle = pos / np.power(10000.0, 2.0 * (idx // 2) / d_hid)
    table = np.zeros((n_position, d_hid), dtype=np.float64)
    table[:, 0::2] = np.sin(angle[:, 0::2])
    table[:, 1::2] = np.cos(angle[:, 1::2])
    if padding_idx is not None:
        table[padding_idx] = 0.0
    return jnp.asarray(table, dtype=jnp.float32)


def init_params(key, n_src_vocab, len_max_seq, d_word_vec, hidden_size,
                d_inner, n_layers, n_head, d_k, d_v):
    keys = jax.random.split(key, 2 + n_layers)

    emb = 0.02 * jax.random.normal(keys[0], (n_src_vocab, d_word_vec), jnp.float32)
    emb = emb.at[PAD].set(0.0)                       # padding_idx=PAD
    pos_enc = sinusoid_table(len_max_seq + 1, d_word_vec, padding_idx=0)

    layers = []
    for li in range(n_layers):
        lk = jax.random.split(keys[2 + li], 8)
        D = d_word_vec
        layers.append([
            0.02 * jax.random.normal(lk[0], (D, n_head * d_k), jnp.float32),  # w_qs
            jnp.zeros((1, n_head * d_k), jnp.float32),                        # b_qs
            0.02 * jax.random.normal(lk[1], (D, n_head * d_k), jnp.float32),  # w_ks
            jnp.zeros((1, n_head * d_k), jnp.float32),                        # b_ks
            0.02 * jax.random.normal(lk[2], (D, n_head * d_v), jnp.float32),  # w_vs
            jnp.zeros((1, n_head * d_v), jnp.float32),                        # b_vs
            0.02 * jax.random.normal(lk[3], (n_head * d_v, D), jnp.float32),  # fc w
            jnp.zeros((1, D), jnp.float32),                                   # fc b
            jnp.ones((1, D), jnp.float32),                                    # ln1 g
            jnp.zeros((1, D), jnp.float32),                                   # ln1 b
            0.02 * jax.random.normal(lk[4], (D, d_inner), jnp.float32),       # ffn w1
            jnp.zeros((1, d_inner), jnp.float32),                             # ffn b1
            0.02 * jax.random.normal(lk[5], (d_inner, D), jnp.float32),       # ffn w2
            jnp.zeros((1, D), jnp.float32),                                   # ffn b2
            jnp.ones((1, D), jnp.float32),                                    # ln2 g
            jnp.zeros((1, D), jnp.float32),                                   # ln2 b
        ])

    proj_w = 0.02 * jax.random.normal(keys[1], (d_word_vec, hidden_size), jnp.float32)
    proj_b = jnp.zeros((1, hidden_size), jnp.float32)
    return emb, pos_enc, layers, proj_w, proj_b


def pack_params(params, hidden_size, mm_dtype):
    """Stack per-layer weights along a leading (n_layers,) axis, fuse QKV,
    cast matmul operands to mm_dtype, lane-pad the projection output."""
    emb, pos_enc, layers, proj_w, proj_b = params
    n_layers = len(layers)

    def stack(idx):
        return jnp.stack([layers[li][idx] for li in range(n_layers)], axis=0)

    wq, bq, wk, bk, wv, bv = (stack(i) for i in range(6))
    wqkv = jnp.concatenate([wq, wk, wv], axis=-1).astype(mm_dtype)
    bqkv = jnp.concatenate([bq, bk, bv], axis=-1)
    fcw, fcb = stack(6).astype(mm_dtype), stack(7)
    ln1g, ln1b = stack(8), stack(9)
    w1, b1 = stack(10).astype(mm_dtype), stack(11)
    w2, b2 = stack(12).astype(mm_dtype), stack(13)
    ln2g, ln2b = stack(14), stack(15)

    d_model = proj_w.shape[0]
    h_pad = ((hidden_size + 127) // 128) * 128        # lane-dense output store
    pw = jnp.zeros((d_model, h_pad), jnp.float32).at[:, :hidden_size].set(proj_w)
    pw = pw.astype(mm_dtype)
    pb = jnp.zeros((1, h_pad), jnp.float32).at[:, :hidden_size].set(proj_b)

    stacked = (wqkv, bqkv, fcw, fcb, ln1g, ln1b, w1, b1, w2, b2, ln2g, ln2b)
    return emb, pos_enc, stacked, pw, pb


def transformer_encoder_forward(src_seq, len_src_seq, packed,
                                len_max_seq, hidden_size, n_head, d_k, d_v,
                                mm_dtype=jnp.float32):
    emb, pos_enc, stacked, proj_w, proj_b = packed
    B, L = src_seq.shape
    assert L == len_max_seq
    D = emb.shape[1]

    # src_pos: 1..len for valid tokens, 0 for padding
    t = jnp.arange(1, L + 1, dtype=jnp.int32)[None, :]
    src_pos = jnp.where(t <= len_src_seq[:, None].astype(jnp.int32), t, 0)

    # masks (hoisted once; key mask as additive bias)
    non_pad = (src_seq != PAD).astype(jnp.float32).reshape(B * L, 1)
    key_bias = jnp.where(src_seq == PAD, NEG_BIG, 0.0).astype(jnp.float32)[:, None, :]

    # embedding gathers (plain-JAX glue), flattened to (B*L, D)
    x = (emb[src_seq] + pos_enc[src_pos]).astype(jnp.float32).reshape(B * L, D)

    out = run_encoder_stack(x, non_pad, key_bias, stacked, proj_w, proj_b,
                            B, L, n_head, d_k, d_v, mm_dtype)
    return out.reshape(B, L, -1)[:, :, :hidden_size]


# ---------------------------------------------------------------------------
if __name__ == "__main__":
    # small, module-consistent shapes
    n_src_vocab = 50
    len_max_seq = 8
    d_word_vec = 32          # == d_model
    hidden_size = 48
    d_inner = 64
    n_layers = 2
    n_head = 4
    d_k = d_v = 8
    B = 2

    key = jax.random.PRNGKey(0)
    k_par, k_tok = jax.random.split(key)

    params = init_params(k_par, n_src_vocab, len_max_seq, d_word_vec,
                         hidden_size, d_inner, n_layers, n_head, d_k, d_v)
    mm_dtype = _matmul_dtype()
    packed = pack_params(params, hidden_size, mm_dtype)

    # deterministic example batch: lengths [8, 5], token ids in [1, vocab)
    len_src_seq = jnp.array([8, 5], dtype=jnp.int32)
    tok = jax.random.randint(k_tok, (B, len_max_seq), 1, n_src_vocab, dtype=jnp.int32)
    valid = jnp.arange(len_max_seq, dtype=jnp.int32)[None, :] < len_src_seq[:, None]
    src_seq = jnp.where(valid, tok, PAD)

    out = transformer_encoder_forward(src_seq, len_src_seq, packed,
                                      len_max_seq, hidden_size, n_head, d_k, d_v,
                                      mm_dtype)
    out = jax.block_until_ready(out)
    assert out.shape == (B, len_max_seq, hidden_size)
    assert jnp.all(jnp.isfinite(out))
    print("KERNEL_OK")
</pallas_src>

<mosaic_0001>
module attributes {stable_mosaic.version = 11 : i64} {
  func.func @encoder_stack_kernel(%arg0: i32, %arg1: i32, %arg2: memref<16x32xf32, #tpu.memory_space<vmem>>, %arg3: memref<16x1xf32, #tpu.memory_space<vmem>>, %arg4: memref<2x1x8xf32, #tpu.memory_space<vmem>>, %arg5: memref<1x32x96xf32, #tpu.memory_space<vmem>>, %arg6: memref<1x1x96xf32, #tpu.memory_space<vmem>>, %arg7: memref<1x32x32xf32, #tpu.memory_space<vmem>>, %arg8: memref<1x1x32xf32, #tpu.memory_space<vmem>>, %arg9: memref<1x1x32xf32, #tpu.memory_space<vmem>>, %arg10: memref<1x1x32xf32, #tpu.memory_space<vmem>>, %arg11: memref<1x32x64xf32, #tpu.memory_space<vmem>>, %arg12: memref<1x1x64xf32, #tpu.memory_space<vmem>>, %arg13: memref<1x64x32xf32, #tpu.memory_space<vmem>>, %arg14: memref<1x1x32xf32, #tpu.memory_space<vmem>>, %arg15: memref<1x1x32xf32, #tpu.memory_space<vmem>>, %arg16: memref<1x1x32xf32, #tpu.memory_space<vmem>>, %arg17: memref<32x128xf32, #tpu.memory_space<vmem>>, %arg18: memref<1x128xf32, #tpu.memory_space<vmem>>, %arg19: memref<16x128xf32, #tpu.memory_space<vmem>>, %arg20: memref<16x32xf32, #tpu.memory_space<vmem>>) attributes {dimension_semantics = [#tpu.dimension_semantics<parallel>, #tpu.dimension_semantics<arbitrary>], iteration_bounds = array<i64: 1, 2>, scalar_prefetch = 0 : i64, scratch_operands = 1 : i64, tpu.core_type = #tpu.core_type<tc>, window_params = [{transform_indices = @transform_0, window_bounds = array<i64: 16, 32>}, {transform_indices = @transform_1, window_bounds = array<i64: 16, 1>}, {transform_indices = @transform_2, window_bounds = array<i64: 2, 1, 8>}, {transform_indices = @transform_3, window_bounds = array<i64: 1, 32, 96>}, {transform_indices = @transform_4, window_bounds = array<i64: 1, 1, 96>}, {transform_indices = @transform_5, window_bounds = array<i64: 1, 32, 32>}, {transform_indices = @transform_6, window_bounds = array<i64: 1, 1, 32>}, {transform_indices = @transform_7, window_bounds = array<i64: 1, 1, 32>}, {transform_indices = @transform_8, window_bounds = array<i64: 1, 1, 32>}, {transform_indices = @transform_9, window_bounds = array<i64: 1, 32, 64>}, {transform_indices = @transform_10, window_bounds = array<i64: 1, 1, 64>}, {transform_indices = @transform_11, window_bounds = array<i64: 1, 64, 32>}, {transform_indices = @transform_12, window_bounds = array<i64: 1, 1, 32>}, {transform_indices = @transform_13, window_bounds = array<i64: 1, 1, 32>}, {transform_indices = @transform_14, window_bounds = array<i64: 1, 1, 32>}, {pipeline_mode = #tpu.pipeline_mode<synchronous>, transform_indices = @transform_15, window_bounds = array<i64: 32, 128>}, {pipeline_mode = #tpu.pipeline_mode<synchronous>, transform_indices = @transform_16, window_bounds = array<i64: 1, 128>}, {transform_indices = @transform_17, window_bounds = array<i64: 16, 128>}]} {
    %c0_i32 = arith.constant 0 : i32
    %0 = arith.cmpi eq, %arg1, %c0_i32 : i32
    %1 = arith.extui %0 : i1 to i32
    %c0_i32_0 = arith.constant 0 : i32
    %2 = arith.cmpi ne, %1, %c0_i32_0 : i32
    scf.if %2 {
      %c0_80 = arith.constant 0 : index
      %c0_81 = arith.constant 0 : index
      %178 = vector.load %arg2[%c0_80, %c0_81] : memref<16x32xf32, #tpu.memory_space<vmem>>, vector<16x32xf32>
      %c0_82 = arith.constant 0 : index
      %c0_83 = arith.constant 0 : index
      %179 = vector.load %arg20[%c0_82, %c0_83] : memref<16x32xf32, #tpu.memory_space<vmem>>, vector<16x32xf32>
      tpu.vector_store %arg20[%c0_82, %c0_83], %178 {strides = array<i32>} : memref<16x32xf32, #tpu.memory_space<vmem>>, vector<16x32xf32>,
    } else {
    }
    %c0 = arith.constant 0 : index
    %c0_1 = arith.constant 0 : index
    %3 = vector.load %arg20[%c0, %c0_1] : memref<16x32xf32, #tpu.memory_space<vmem>>, vector<16x32xf32>
    %c0_2 = arith.constant 0 : index
    %c0_3 = arith.constant 0 : index
    %4 = vector.load %arg3[%c0_2, %c0_3] : memref<16x1xf32, #tpu.memory_space<vmem>>, vector<16x1xf32>
    %c0_4 = arith.constant 0 : index
    %c0_5 = arith.constant 0 : index
    %c0_6 = arith.constant 0 : index
    %5 = vector.load %arg4[%c0_4, %c0_5, %c0_6] : memref<2x1x8xf32, #tpu.memory_space<vmem>>, vector<2x1x8xf32>
    %c0_7 = arith.constant 0 : index
    %c0_8 = arith.constant 0 : index
    %c0_9 = arith.constant 0 : index
    %6 = vector.load %arg5[%c0_7, %c0_8, %c0_9] : memref<1x32x96xf32, #tpu.memory_space<vmem>>, vector<1x32x96xf32>
    %7 = vector.shape_cast %6 : vector<1x32x96xf32> to vector<32x96xf32>
    %cst = arith.constant dense<0.000000e+00> : vector<16x96xf32>
    %8 = tpu.matmul %3, %7, %cst {dimension_numbers = #tpu.dot_dimension_numbers<[1], [0], [0], [1], [0, 0, 1, 1], [], []>} : vector<16x32xf32>, vector<32x96xf32>, vector<16x96xf32> -> vector<16x96xf32>
    %c0_10 = arith.constant 0 : index
    %c0_11 = arith.constant 0 : index
    %c0_12 = arith.constant 0 : index
    %9 = vector.load %arg6[%c0_10, %c0_11, %c0_12] : memref<1x1x96xf32, #tpu.memory_space<vmem>>, vector<1x1x96xf32>
    %10 = vector.shape_cast %9 : vector<1x1x96xf32> to vector<1x96xf32>
    %11 = vector.broadcast %10 : vector<1x96xf32> to vector<16x96xf32>
    %12 = arith.addf %8, %11 : vector<16x96xf32>
    %13 = vector.extract_strided_slice %12 {offsets = [0, 0], sizes = [16, 32], strides = [1, 1]} : vector<16x96xf32> to vector<16x32xf32>
    %14 = vector.shape_cast %13 : vector<16x32xf32> to vector<2x8x32xf32>
    %15 = vector.extract_strided_slice %12 {offsets = [0, 32], sizes = [16, 32], strides = [1, 1]} : vector<16x96xf32> to vector<16x32xf32>
    %16 = vector.shape_cast %15 : vector<16x32xf32> to vector<2x8x32xf32>
    %17 = vector.extract_strided_slice %12 {offsets = [0, 64], sizes = [16, 32], strides = [1, 1]} : vector<16x96xf32> to vector<16x32xf32>
    %18 = vector.shape_cast %17 : vector<16x32xf32> to vector<2x8x32xf32>
    %19 = vector.extract_strided_slice %14 {offsets = [0, 0, 0], sizes = [2, 8, 8], strides = [1, 1, 1]} : vector<2x8x32xf32> to vector<2x8x8xf32>
    %20 = vector.extract_strided_slice %16 {offsets = [0, 0, 0], sizes = [2, 8, 8], strides = [1, 1, 1]} : vector<2x8x32xf32> to vector<2x8x8xf32>
    %21 = vector.extract_strided_slice %18 {offsets = [0, 0, 0], sizes = [2, 8, 8], strides = [1, 1, 1]} : vector<2x8x32xf32> to vector<2x8x8xf32>
    "tpu.trace_start"() <{level = 10 : i32, message = "bqd,bkd->bqk"}> : () -> ()
    %cst_13 = arith.constant dense<0.000000e+00> : vector<2x8x8xf32>
    %22 = tpu.matmul %19, %20, %cst_13 {dimension_numbers = #tpu.dot_dimension_numbers<[2], [2], [1], [1], [0, 0, 0, 1, 1, 1], [0], [0]>} : vector<2x8x8xf32>, vector<2x8x8xf32>, vector<2x8x8xf32> -> vector<2x8x8xf32>
    "tpu.trace_stop"() : () -> ()
    %cst_14 = arith.constant 0.353553385 : f32
    %23 = vector.broadcast %cst_14 : f32 to vector<2x8x8xf32>
    %24 = arith.mulf %22, %23 : vector<2x8x8xf32>
    %25 = vector.broadcast %5 : vector<2x1x8xf32> to vector<2x8x8xf32>
    %26 = arith.addf %24, %25 : vector<2x8x8xf32>
    %cst_15 = arith.constant dense<0xFF800000> : vector<2x8xf32>
    %27 = vector.multi_reduction <maximumf>, %26, %cst_15 [2] : vector<2x8x8xf32> to vector<2x8xf32>
    %28 = vector.shape_cast %27 : vector<2x8xf32> to vector<2x8x1xf32>
    %29 = vector.broadcast %28 : vector<2x8x1xf32> to vector<2x8x8xf32>
    %30 = arith.subf %26, %29 : vector<2x8x8xf32>
    %31 = math.exp %30 : vector<2x8x8xf32>
    %cst_16 = arith.constant dense<0.000000e+00> : vector<2x8xf32>
    %32 = vector.multi_reduction <add>, %31, %cst_16 [2] : vector<2x8x8xf32> to vector<2x8xf32>
    %33 = vector.shape_cast %32 : vector<2x8xf32> to vector<2x8x1xf32>
    %34 = tpu.reciprocal %33 {approx = true} : vector<2x8x1xf32> -> vector<2x8x1xf32>
    %35 = vector.broadcast %34 : vector<2x8x1xf32> to vector<2x8x8xf32>
    %36 = arith.mulf %31, %35 : vector<2x8x8xf32>
    "tpu.trace_start"() <{level = 10 : i32, message = "bqk,bkd->bqd"}> : () -> ()
    %cst_17 = arith.constant dense<0.000000e+00> : vector<2x8x8xf32>
    %37 = tpu.matmul %36, %21, %cst_17 {dimension_numbers = #tpu.dot_dimension_numbers<[2], [1], [1], [2], [0, 0, 0, 1, 1, 2], [0], [0]>} : vector<2x8x8xf32>, vector<2x8x8xf32>, vector<2x8x8xf32> -> vector<2x8x8xf32>
    "tpu.trace_stop"() : () -> ()
    %38 = vector.extract_strided_slice %14 {offsets = [0, 0, 8], sizes = [2, 8, 8], strides = [1, 1, 1]} : vector<2x8x32xf32> to vector<2x8x8xf32>
    %39 = vector.extract_strided_slice %16 {offsets = [0, 0, 8], sizes = [2, 8, 8], strides = [1, 1, 1]} : vector<2x8x32xf32> to vector<2x8x8xf32>
    %40 = vector.extract_strided_slice %18 {offsets = [0, 0, 8], sizes = [2, 8, 8], strides = [1, 1, 1]} : vector<2x8x32xf32> to vector<2x8x8xf32>
    "tpu.trace_start"() <{level = 10 : i32, message = "bqd,bkd->bqk"}> : () -> ()
    %cst_18 = arith.constant dense<0.000000e+00> : vector<2x8x8xf32>
    %41 = tpu.matmul %38, %39, %cst_18 {dimension_numbers = #tpu.dot_dimension_numbers<[2], [2], [1], [1], [0, 0, 0, 1, 1, 1], [0], [0]>} : vector<2x8x8xf32>, vector<2x8x8xf32>, vector<2x8x8xf32> -> vector<2x8x8xf32>
    "tpu.trace_stop"() : () -> ()
    %cst_19 = arith.constant 0.353553385 : f32
    %42 = vector.broadcast %cst_19 : f32 to vector<2x8x8xf32>
    %43 = arith.mulf %41, %42 : vector<2x8x8xf32>
    %44 = vector.broadcast %5 : vector<2x1x8xf32> to vector<2x8x8xf32>
    %45 = arith.addf %43, %44 : vector<2x8x8xf32>
    %cst_20 = arith.constant dense<0xFF800000> : vector<2x8xf32>
    %46 = vector.multi_reduction <maximumf>, %45, %cst_20 [2] : vector<2x8x8xf32> to vector<2x8xf32>
    %47 = vector.shape_cast %46 : vector<2x8xf32> to vector<2x8x1xf32>
    %48 = vector.broadcast %47 : vector<2x8x1xf32> to vector<2x8x8xf32>
    %49 = arith.subf %45, %48 : vector<2x8x8xf32>
    %50 = math.exp %49 : vector<2x8x8xf32>
    %cst_21 = arith.constant dense<0.000000e+00> : vector<2x8xf32>
    %51 = vector.multi_reduction <add>, %50, %cst_21 [2] : vector<2x8x8xf32> to vector<2x8xf32>
    %52 = vector.shape_cast %51 : vector<2x8xf32> to vector<2x8x1xf32>
    %53 = tpu.reciprocal %52 {approx = true} : vector<2x8x1xf32> -> vector<2x8x1xf32>
    %54 = vector.broadcast %53 : vector<2x8x1xf32> to vector<2x8x8xf32>
    %55 = arith.mulf %50, %54 : vector<2x8x8xf32>
    "tpu.trace_start"() <{level = 10 : i32, message = "bqk,bkd->bqd"}> : () -> ()
    %cst_22 = arith.constant dense<0.000000e+00> : vector<2x8x8xf32>
    %56 = tpu.matmul %55, %40, %cst_22 {dimension_numbers = #tpu.dot_dimension_numbers<[2], [1], [1], [2], [0, 0, 0, 1, 1, 2], [0], [0]>} : vector<2x8x8xf32>, vector<2x8x8xf32>, vector<2x8x8xf32> -> vector<2x8x8xf32>
    "tpu.trace_stop"() : () -> ()
    %57 = vector.extract_strided_slice %14 {offsets = [0, 0, 16], sizes = [2, 8, 8], strides = [1, 1, 1]} : vector<2x8x32xf32> to vector<2x8x8xf32>
    %58 = vector.extract_strided_slice %16 {offsets = [0, 0, 16], sizes = [2, 8, 8], strides = [1, 1, 1]} : vector<2x8x32xf32> to vector<2x8x8xf32>
    %59 = vector.extract_strided_slice %18 {offsets = [0, 0, 16], sizes = [2, 8, 8], strides = [1, 1, 1]} : vector<2x8x32xf32> to vector<2x8x8xf32>
    "tpu.trace_start"() <{level = 10 : i32, message = "bqd,bkd->bqk"}> : () -> ()
    %cst_23 = arith.constant dense<0.000000e+00> : vector<2x8x8xf32>
    %60 = tpu.matmul %57, %58, %cst_23 {dimension_numbers = #tpu.dot_dimension_numbers<[2], [2], [1], [1], [0, 0, 0, 1, 1, 1], [0], [0]>} : vector<2x8x8xf32>, vector<2x8x8xf32>, vector<2x8x8xf32> -> vector<2x8x8xf32>
    "tpu.trace_stop"() : () -> ()
    %cst_24 = arith.constant 0.353553385 : f32
    %61 = vector.broadcast %cst_24 : f32 to vector<2x8x8xf32>
    %62 = arith.mulf %60, %61 : vector<2x8x8xf32>
    %63 = vector.broadcast %5 : vector<2x1x8xf32> to vector<2x8x8xf32>
    %64 = arith.addf %62, %63 : vector<2x8x8xf32>
    %cst_25 = arith.constant dense<0xFF800000> : vector<2x8xf32>
    %65 = vector.multi_reduction <maximumf>, %64, %cst_25 [2] : vector<2x8x8xf32> to vector<2x8xf32>
    %66 = vector.shape_cast %65 : vector<2x8xf32> to vector<2x8x1xf32>
    %67 = vector.broadcast %66 : vector<2x8x1xf32> to vector<2x8x8xf32>
    %68 = arith.subf %64, %67 : vector<2x8x8xf32>
    %69 = math.exp %68 : vector<2x8x8xf32>
    %cst_26 = arith.constant dense<0.000000e+00> : vector<2x8xf32>
    %70 = vector.multi_reduction <add>, %69, %cst_26 [2] : vector<2x8x8xf32> to vector<2x8xf32>
    %71 = vector.shape_cast %70 : vector<2x8xf32> to vector<2x8x1xf32>
    %72 = tpu.reciprocal %71 {approx = true} : vector<2x8x1xf32> -> vector<2x8x1xf32>
    %73 = vector.broadcast %72 : vector<2x8x1xf32> to vector<2x8x8xf32>
    %74 = arith.mulf %69, %73 : vector<2x8x8xf32>
    "tpu.trace_start"() <{level = 10 : i32, message = "bqk,bkd->bqd"}> : () -> ()
    %cst_27 = arith.constant dense<0.000000e+00> : vector<2x8x8xf32>
    %75 = tpu.matmul %74, %59, %cst_27 {dimension_numbers = #tpu.dot_dimension_numbers<[2], [1], [1], [2], [0, 0, 0, 1, 1, 2], [0], [0]>} : vector<2x8x8xf32>, vector<2x8x8xf32>, vector<2x8x8xf32> -> vector<2x8x8xf32>
    "tpu.trace_stop"() : () -> ()
    %76 = vector.extract_strided_slice %14 {offsets = [0, 0, 24], sizes = [2, 8, 8], strides = [1, 1, 1]} : vector<2x8x32xf32> to vector<2x8x8xf32>
    %77 = vector.extract_strided_slice %16 {offsets = [0, 0, 24], sizes = [2, 8, 8], strides = [1, 1, 1]} : vector<2x8x32xf32> to vector<2x8x8xf32>
    %78 = vector.extract_strided_slice %18 {offsets = [0, 0, 24], sizes = [2, 8, 8], strides = [1, 1, 1]} : vector<2x8x32xf32> to vector<2x8x8xf32>
    "tpu.trace_start"() <{level = 10 : i32, message = "bqd,bkd->bqk"}> : () -> ()
    %cst_28 = arith.constant dense<0.000000e+00> : vector<2x8x8xf32>
    %79 = tpu.matmul %76, %77, %cst_28 {dimension_numbers = #tpu.dot_dimension_numbers<[2], [2], [1], [1], [0, 0, 0, 1, 1, 1], [0], [0]>} : vector<2x8x8xf32>, vector<2x8x8xf32>, vector<2x8x8xf32> -> vector<2x8x8xf32>
    "tpu.trace_stop"() : () -> ()
    %cst_29 = arith.constant 0.353553385 : f32
    %80 = vector.broadcast %cst_29 : f32 to vector<2x8x8xf32>
    %81 = arith.mulf %79, %80 : vector<2x8x8xf32>
    %82 = vector.broadcast %5 : vector<2x1x8xf32> to vector<2x8x8xf32>
    %83 = arith.addf %81, %82 : vector<2x8x8xf32>
    %cst_30 = arith.constant dense<0xFF800000> : vector<2x8xf32>
    %84 = vector.multi_reduction <maximumf>, %83, %cst_30 [2] : vector<2x8x8xf32> to vector<2x8xf32>
    %85 = vector.shape_cast %84 : vector<2x8xf32> to vector<2x8x1xf32>
    %86 = vector.broadcast %85 : vector<2x8x1xf32> to vector<2x8x8xf32>
    %87 = arith.subf %83, %86 : vector<2x8x8xf32>
    %88 = math.exp %87 : vector<2x8x8xf32>
    %cst_31 = arith.constant dense<0.000000e+00> : vector<2x8xf32>
    %89 = vector.multi_reduction <add>, %88, %cst_31 [2] : vector<2x8x8xf32> to vector<2x8xf32>
    %90 = vector.shape_cast %89 : vector<2x8xf32> to vector<2x8x1xf32>
    %91 = tpu.reciprocal %90 {approx = true} : vector<2x8x1xf32> -> vector<2x8x1xf32>
    %92 = vector.broadcast %91 : vector<2x8x1xf32> to vector<2x8x8xf32>
    %93 = arith.mulf %88, %92 : vector<2x8x8xf32>
    "tpu.trace_start"() <{level = 10 : i32, message = "bqk,bkd->bqd"}> : () -> ()
    %cst_32 = arith.constant dense<0.000000e+00> : vector<2x8x8xf32>
    %94 = tpu.matmul %93, %78, %cst_32 {dimension_numbers = #tpu.dot_dimension_numbers<[2], [1], [1], [2], [0, 0, 0, 1, 1, 2], [0], [0]>} : vector<2x8x8xf32>, vector<2x8x8xf32>, vector<2x8x8xf32> -> vector<2x8x8xf32>
    "tpu.trace_stop"() : () -> ()
    %95 = tpu.concatenate %37, %56, %75, %94 in 2 : vector<2x8x8xf32>, vector<2x8x8xf32>, vector<2x8x8xf32>, vector<2x8x8xf32> -> vector<2x8x32xf32>
    %96 = vector.shape_cast %95 : vector<2x8x32xf32> to vector<16x32xf32>
    %c0_33 = arith.constant 0 : index
    %c0_34 = arith.constant 0 : index
    %c0_35 = arith.constant 0 : index
    %97 = vector.load %arg7[%c0_33, %c0_34, %c0_35] : memref<1x32x32xf32, #tpu.memory_space<vmem>>, vector<1x32x32xf32>
    %98 = vector.shape_cast %97 : vector<1x32x32xf32> to vector<32x32xf32>
    %cst_36 = arith.constant dense<0.000000e+00> : vector<16x32xf32>
    %99 = tpu.matmul %96, %98, %cst_36 {dimension_numbers = #tpu.dot_dimension_numbers<[1], [0], [0], [1], [0, 0, 1, 1], [], []>} : vector<16x32xf32>, vector<32x32xf32>, vector<16x32xf32> -> vector<16x32xf32>
    %c0_37 = arith.constant 0 : index
    %c0_38 = arith.constant 0 : index
    %c0_39 = arith.constant 0 : index
    %100 = vector.load %arg8[%c0_37, %c0_38, %c0_39] : memref<1x1x32xf32, #tpu.memory_space<vmem>>, vector<1x1x32xf32>
    %101 = vector.shape_cast %100 : vector<1x1x32xf32> to vector<1x32xf32>
    %102 = vector.broadcast %101 : vector<1x32xf32> to vector<16x32xf32>
    %103 = arith.addf %99, %102 : vector<16x32xf32>
    %104 = arith.addf %103, %3 : vector<16x32xf32>
    %cst_40 = arith.constant dense<0.000000e+00> : vector<16xf32>
    %105 = vector.multi_reduction <add>, %104, %cst_40 [1] : vector<16x32xf32> to vector<16xf32>
    %106 = vector.shape_cast %105 : vector<16xf32> to vector<16x1xf32>
    %cst_41 = arith.constant 3.200000e+01 : f32
    %107 = vector.broadcast %cst_41 : f32 to vector<16x1xf32>
    %108 = arith.divf %106, %107 : vector<16x1xf32>
    %109 = vector.broadcast %108 : vector<16x1xf32> to vector<16x32xf32>
    %110 = arith.subf %104, %109 : vector<16x32xf32>
    %111 = arith.mulf %110, %110 : vector<16x32xf32>
    %cst_42 = arith.constant dense<0.000000e+00> : vector<16xf32>
    %112 = vector.multi_reduction <add>, %111, %cst_42 [1] : vector<16x32xf32> to vector<16xf32>
    %113 = vector.shape_cast %112 : vector<16xf32> to vector<16x1xf32>
    %cst_43 = arith.constant 3.200000e+01 : f32
    %114 = vector.broadcast %cst_43 : f32 to vector<16x1xf32>
    %115 = arith.divf %113, %114 : vector<16x1xf32>
    %cst_44 = arith.constant 9.99999974E-6 : f32
    %116 = vector.broadcast %cst_44 : f32 to vector<16x1xf32>
    %117 = arith.addf %115, %116 : vector<16x1xf32>
    %118 = math.rsqrt %117 : vector<16x1xf32>
    %119 = vector.broadcast %118 : vector<16x1xf32> to vector<16x32xf32>
    %120 = arith.mulf %110, %119 : vector<16x32xf32>
    %c0_45 = arith.constant 0 : index
    %c0_46 = arith.constant 0 : index
    %c0_47 = arith.constant 0 : index
    %121 = vector.load %arg9[%c0_45, %c0_46, %c0_47] : memref<1x1x32xf32, #tpu.memory_space<vmem>>, vector<1x1x32xf32>
    %122 = vector.shape_cast %121 : vector<1x1x32xf32> to vector<1x32xf32>
    %123 = vector.broadcast %122 : vector<1x32xf32> to vector<16x32xf32>
    %124 = arith.mulf %120, %123 : vector<16x32xf32>
    %c0_48 = arith.constant 0 : index
    %c0_49 = arith.constant 0 : index
    %c0_50 = arith.constant 0 : index
    %125 = vector.load %arg10[%c0_48, %c0_49, %c0_50] : memref<1x1x32xf32, #tpu.memory_space<vmem>>, vector<1x1x32xf32>
    %126 = vector.shape_cast %125 : vector<1x1x32xf32> to vector<1x32xf32>
    %127 = vector.broadcast %126 : vector<1x32xf32> to vector<16x32xf32>
    %128 = arith.addf %124, %127 : vector<16x32xf32>
    %129 = vector.broadcast %4 : vector<16x1xf32> to vector<16x32xf32>
    %130 = arith.mulf %128, %129 : vector<16x32xf32>
    %c0_51 = arith.constant 0 : index
    %c0_52 = arith.constant 0 : index
    %c0_53 = arith.constant 0 : index
    %131 = vector.load %arg11[%c0_51, %c0_52, %c0_53] : memref<1x32x64xf32, #tpu.memory_space<vmem>>, vector<1x32x64xf32>
    %132 = vector.shape_cast %131 : vector<1x32x64xf32> to vector<32x64xf32>
    %cst_54 = arith.constant dense<0.000000e+00> : vector<16x64xf32>
    %133 = tpu.matmul %130, %132, %cst_54 {dimension_numbers = #tpu.dot_dimension_numbers<[1], [0], [0], [1], [0, 0, 1, 1], [], []>} : vector<16x32xf32>, vector<32x64xf32>, vector<16x64xf32> -> vector<16x64xf32>
    %c0_55 = arith.constant 0 : index
    %c0_56 = arith.constant 0 : index
    %c0_57 = arith.constant 0 : index
    %134 = vector.load %arg12[%c0_55, %c0_56, %c0_57] : memref<1x1x64xf32, #tpu.memory_space<vmem>>, vector<1x1x64xf32>
    %135 = vector.shape_cast %134 : vector<1x1x64xf32> to vector<1x64xf32>
    %136 = vector.broadcast %135 : vector<1x64xf32> to vector<16x64xf32>
    %137 = arith.addf %133, %136 : vector<16x64xf32>
    %cst_58 = arith.constant 0.000000e+00 : f32
    %138 = vector.broadcast %cst_58 : f32 to vector<16x64xf32>
    %139 = arith.maximumf %137, %138 : vector<16x64xf32>
    %c0_59 = arith.constant 0 : index
    %c0_60 = arith.constant 0 : index
    %c0_61 = arith.constant 0 : index
    %140 = vector.load %arg13[%c0_59, %c0_60, %c0_61] : memref<1x64x32xf32, #tpu.memory_space<vmem>>, vector<1x64x32xf32>
    %141 = vector.shape_cast %140 : vector<1x64x32xf32> to vector<64x32xf32>
    %cst_62 = arith.constant dense<0.000000e+00> : vector<16x32xf32>
    %142 = tpu.matmul %139, %141, %cst_62 {dimension_numbers = #tpu.dot_dimension_numbers<[1], [0], [0], [1], [0, 0, 1, 1], [], []>} : vector<16x64xf32>, vector<64x32xf32>, vector<16x32xf32> -> vector<16x32xf32>
    %c0_63 = arith.constant 0 : index
    %c0_64 = arith.constant 0 : index
    %c0_65 = arith.constant 0 : index
    %143 = vector.load %arg14[%c0_63, %c0_64, %c0_65] : memref<1x1x32xf32, #tpu.memory_space<vmem>>, vector<1x1x32xf32>
    %144 = vector.shape_cast %143 : vector<1x1x32xf32> to vector<1x32xf32>
    %145 = vector.broadcast %144 : vector<1x32xf32> to vector<16x32xf32>
    %146 = arith.addf %142, %145 : vector<16x32xf32>
    %147 = arith.addf %146, %130 : vector<16x32xf32>
    %cst_66 = arith.constant dense<0.000000e+00> : vector<16xf32>
    %148 = vector.multi_reduction <add>, %147, %cst_66 [1] : vector<16x32xf32> to vector<16xf32>
    %149 = vector.shape_cast %148 : vector<16xf32> to vector<16x1xf32>
    %cst_67 = arith.constant 3.200000e+01 : f32
    %150 = vector.broadcast %cst_67 : f32 to vector<16x1xf32>
    %151 = arith.divf %149, %150 : vector<16x1xf32>
    %152 = vector.broadcast %151 : vector<16x1xf32> to vector<16x32xf32>
    %153 = arith.subf %147, %152 : vector<16x32xf32>
    %154 = arith.mulf %153, %153 : vector<16x32xf32>
    %cst_68 = arith.constant dense<0.000000e+00> : vector<16xf32>
    %155 = vector.multi_reduction <add>, %154, %cst_68 [1] : vector<16x32xf32> to vector<16xf32>
    %156 = vector.shape_cast %155 : vector<16xf32> to vector<16x1xf32>
    %cst_69 = arith.constant 3.200000e+01 : f32
    %157 = vector.broadcast %cst_69 : f32 to vector<16x1xf32>
    %158 = arith.divf %156, %157 : vector<16x1xf32>
    %cst_70 = arith.constant 9.99999974E-6 : f32
    %159 = vector.broadcast %cst_70 : f32 to vector<16x1xf32>
    %160 = arith.addf %158, %159 : vector<16x1xf32>
    %161 = math.rsqrt %160 : vector<16x1xf32>
    %162 = vector.broadcast %161 : vector<16x1xf32> to vector<16x32xf32>
    %163 = arith.mulf %153, %162 : vector<16x32xf32>
    %c0_71 = arith.constant 0 : index
    %c0_72 = arith.constant 0 : index
    %c0_73 = arith.constant 0 : index
    %164 = vector.load %arg15[%c0_71, %c0_72, %c0_73] : memref<1x1x32xf32, #tpu.memory_space<vmem>>, vector<1x1x32xf32>
    %165 = vector.shape_cast %164 : vector<1x1x32xf32> to vector<1x32xf32>
    %166 = vector.broadcast %165 : vector<1x32xf32> to vector<16x32xf32>
    %167 = arith.mulf %163, %166 : vector<16x32xf32>
    %c0_74 = arith.constant 0 : index
    %c0_75 = arith.constant 0 : index
    %c0_76 = arith.constant 0 : index
    %168 = vector.load %arg16[%c0_74, %c0_75, %c0_76] : memref<1x1x32xf32, #tpu.memory_space<vmem>>, vector<1x1x32xf32>
    %169 = vector.shape_cast %168 : vector<1x1x32xf32> to vector<1x32xf32>
    %170 = vector.broadcast %169 : vector<1x32xf32> to vector<16x32xf32>
    %171 = arith.addf %167, %170 : vector<16x32xf32>
    %172 = vector.broadcast %4 : vector<16x1xf32> to vector<16x32xf32>
    %173 = arith.mulf %171, %172 : vector<16x32xf32>
    %c0_77 = arith.constant 0 : index
    %c0_78 = arith.constant 0 : index
    %174 = vector.load %arg20[%c0_77, %c0_78] : memref<16x32xf32, #tpu.memory_space<vmem>>, vector<16x32xf32>
    tpu.vector_store %arg20[%c0_77, %c0_78], %173 {strides = array<i32>} : memref<16x32xf32, #tpu.memory_space<vmem>>, vector<16x32xf32>,
    %c1_i32 = arith.constant 1 : i32
    %175 = arith.cmpi eq, %arg1, %c1_i32 : i32
    %176 = arith.extui %175 : i1 to i32
    %c0_i32_79 = arith.constant 0 : i32
    %177 = arith.cmpi ne, %176, %c0_i32_79 : i32
    scf.if %177 {
      %c0_80 = arith.constant 0 : index
      %c0_81 = arith.constant 0 : index
      %178 = vector.load %arg17[%c0_80, %c0_81] : memref<32x128xf32, #tpu.memory_space<vmem>>, vector<32x128xf32>
      %cst_82 = arith.constant dense<0.000000e+00> : vector<16x128xf32>
      %179 = tpu.matmul %173, %178, %cst_82 {dimension_numbers = #tpu.dot_dimension_numbers<[1], [0], [0], [1], [0, 0, 1, 1], [], []>} : vector<16x32xf32>, vector<32x128xf32>, vector<16x128xf32> -> vector<16x128xf32>
      %c0_83 = arith.constant 0 : index
      %c0_84 = arith.constant 0 : index
      %180 = vector.load %arg18[%c0_83, %c0_84] : memref<1x128xf32, #tpu.memory_space<vmem>>, vector<1x128xf32>
      %181 = vector.broadcast %180 : vector<1x128xf32> to vector<16x128xf32>
      %182 = arith.addf %179, %181 : vector<16x128xf32>
      %c0_85 = arith.constant 0 : index
      %c0_86 = arith.constant 0 : index
      %183 = vector.load %arg19[%c0_85, %c0_86] : memref<16x128xf32, #tpu.memory_space<vmem>>, vector<16x128xf32>
      tpu.vector_store %arg19[%c0_85, %c0_86], %182 {strides = array<i32>} : memref<16x128xf32, #tpu.memory_space<vmem>>, vector<16x128xf32>,
    } else {
    }
    return
  }
  func.func @transform_0(%arg0: i32, %arg1: i32) -> (i32, i32) {
    %c0_i32 = arith.constant 0 : i32
    %c0_i32_0 = arith.constant 0 : i32
    return %arg0, %c0_i32 : i32, i32
  }
  func.func @transform_1(%arg0: i32, %arg1: i32) -> (i32, i32) {
    %c0_i32 = arith.constant 0 : i32
    %c0_i32_0 = arith.constant 0 : i32
    return %arg0, %c0_i32 : i32, i32
  }
  func.func @transform_2(%arg0: i32, %arg1: i32) -> (i32, i32, i32) {
    %c0_i32 = arith.constant 0 : i32
    %c0_i32_0 = arith.constant 0 : i32
    %c0_i32_1 = arith.constant 0 : i32
    return %arg0, %c0_i32, %c0_i32_0 : i32, i32, i32
  }
  func.func @transform_3(%arg0: i32, %arg1: i32) -> (i32, i32, i32) {
    %c0_i32 = arith.constant 0 : i32
    %c0_i32_0 = arith.constant 0 : i32
    %c0_i32_1 = arith.constant 0 : i32
    return %arg1, %c0_i32, %c0_i32_0 : i32, i32, i32
  }
  func.func @transform_4(%arg0: i32, %arg1: i32) -> (i32, i32, i32) {
    %c0_i32 = arith.constant 0 : i32
    %c0_i32_0 = arith.constant 0 : i32
    %c0_i32_1 = arith.constant 0 : i32
    return %arg1, %c0_i32, %c0_i32_0 : i32, i32, i32
  }
  func.func @transform_5(%arg0: i32, %arg1: i32) -> (i32, i32, i32) {
    %c0_i32 = arith.constant 0 : i32
    %c0_i32_0 = arith.constant 0 : i32
    %c0_i32_1 = arith.constant 0 : i32
    return %arg1, %c0_i32, %c0_i32_0 : i32, i32, i32
  }
  func.func @transform_6(%arg0: i32, %arg1: i32) -> (i32, i32, i32) {
    %c0_i32 = arith.constant 0 : i32
    %c0_i32_0 = arith.constant 0 : i32
    %c0_i32_1 = arith.constant 0 : i32
    return %arg1, %c0_i32, %c0_i32_0 : i32, i32, i32
  }
  func.func @transform_7(%arg0: i32, %arg1: i32) -> (i32, i32, i32) {
    %c0_i32 = arith.constant 0 : i32
    %c0_i32_0 = arith.constant 0 : i32
    %c0_i32_1 = arith.constant 0 : i32
    return %arg1, %c0_i32, %c0_i32_0 : i32, i32, i32
  }
  func.func @transform_8(%arg0: i32, %arg1: i32) -> (i32, i32, i32) {
    %c0_i32 = arith.constant 0 : i32
    %c0_i32_0 = arith.constant 0 : i32
    %c0_i32_1 = arith.constant 0 : i32
    return %arg1, %c0_i32, %c0_i32_0 : i32, i32, i32
  }
  func.func @transform_9(%arg0: i32, %arg1: i32) -> (i32, i32, i32) {
    %c0_i32 = arith.constant 0 : i32
    %c0_i32_0 = arith.constant 0 : i32
    %c0_i32_1 = arith.constant 0 : i32
    return %arg1, %c0_i32, %c0_i32_0 : i32, i32, i32
  }
  func.func @transform_10(%arg0: i32, %arg1: i32) -> (i32, i32, i32) {
    %c0_i32 = arith.constant 0 : i32
    %c0_i32_0 = arith.constant 0 : i32
    %c0_i32_1 = arith.constant 0 : i32
    return %arg1, %c0_i32, %c0_i32_0 : i32, i32, i32
  }
  func.func @transform_11(%arg0: i32, %arg1: i32) -> (i32, i32, i32) {
    %c0_i32 = arith.constant 0 : i32
    %c0_i32_0 = arith.constant 0 : i32
    %c0_i32_1 = arith.constant 0 : i32
    return %arg1, %c0_i32, %c0_i32_0 : i32, i32, i32
  }
  func.func @transform_12(%arg0: i32, %arg1: i32) -> (i32, i32, i32) {
    %c0_i32 = arith.constant 0 : i32
    %c0_i32_0 = arith.constant 0 : i32
    %c0_i32_1 = arith.constant 0 : i32
    return %arg1, %c0_i32, %c0_i32_0 : i32, i32, i32
  }
  func.func @transform_13(%arg0: i32, %arg1: i32) -> (i32, i32, i32) {
    %c0_i32 = arith.constant 0 : i32
    %c0_i32_0 = arith.constant 0 : i32
    %c0_i32_1 = arith.constant 0 : i32
    return %arg1, %c0_i32, %c0_i32_0 : i32, i32, i32
  }
  func.func @transform_14(%arg0: i32, %arg1: i32) -> (i32, i32, i32) {
    %c0_i32 = arith.constant 0 : i32
    %c0_i32_0 = arith.constant 0 : i32
    %c0_i32_1 = arith.constant 0 : i32
    return %arg1, %c0_i32, %c0_i32_0 : i32, i32, i32
  }
  func.func @transform_15(%arg0: i32, %arg1: i32) -> (i32, i32) {
    %c0_i32 = arith.constant 0 : i32
    %c0_i32_0 = arith.constant 0 : i32
    %c0_i32_1 = arith.constant 0 : i32
    return %c0_i32, %c0_i32_0 : i32, i32
  }
  func.func @transform_16(%arg0: i32, %arg1: i32) -> (i32, i32) {
    %c0_i32 = arith.constant 0 : i32
    %c0_i32_0 = arith.constant 0 : i32
    %c0_i32_1 = arith.constant 0 : i32
    return %c0_i32, %c0_i32_0 : i32, i32
  }
  func.func @transform_17(%arg0: i32, %arg1: i32) -> (i32, i32) {
    %c0_i32 = arith.constant 0 : i32
    %c0_i32_0 = arith.constant 0 : i32
    return %arg0, %c0_i32 : i32, i32
  }
}

</mosaic_0001>

<llo_original>
// kernel: tpu_custom_call.1
$region0: #{tpu_custom_call.1}
  #allocation0 [shape = 'u32[]', space=smem, size = 0x4, offset = 0x4, fixed_abs, tag = 'smem constant byte address 0x4 - core index']
  #allocation1 [shape = 'u32[72,128]{1,0:T(1,128)}', space=vmem, size = 0x9000, scoped, tag = 'internal scratch']
  #allocation2 [shape = 'f32[16,32]{1,0:T(8,128)}', space=vmem, size = 0x2000, scoped, tag = 'scratch operand']
  %s0 = inlined_call_operand.vmem [shape: f32[16,32], index: 0, kind: input, shape index: {}]
  %s1 = inlined_call_operand.vmem [shape: f32[16,1], index: 1, kind: input, shape index: {}]
  %s2 = inlined_call_operand.hbm [shape: f32[2,1,8], index: 2, kind: input, shape index: {}]
  %s3 = inlined_call_operand.vmem [shape: f32[2,32,96], index: 3, kind: input, shape index: {}]
  %s4 = inlined_call_operand.vmem [shape: f32[2,1,96], index: 4, kind: input, shape index: {}]
  %s5 = inlined_call_operand.vmem [shape: f32[2,32,32], index: 5, kind: input, shape index: {}]
  %s6 = inlined_call_operand.vmem [shape: f32[2,1,32], index: 6, kind: input, shape index: {}]
  %s7 = inlined_call_operand.vmem [shape: f32[2,1,32], index: 7, kind: input, shape index: {}]
  %s8 = inlined_call_operand.hbm [shape: f32[2,1,32], index: 8, kind: input, shape index: {}]
  %s9 = inlined_call_operand.vmem [shape: f32[2,32,64], index: 9, kind: input, shape index: {}]
  %s10 = inlined_call_operand.vmem [shape: f32[2,1,64], index: 10, kind: input, shape index: {}]
  %s11 = inlined_call_operand.vmem [shape: f32[2,64,32], index: 11, kind: input, shape index: {}]
  %s12 = inlined_call_operand.vmem [shape: f32[2,1,32], index: 12, kind: input, shape index: {}]
  %s13 = inlined_call_operand.vmem [shape: f32[2,1,32], index: 13, kind: input, shape index: {}]
  %s14 = inlined_call_operand.hbm [shape: f32[2,1,32], index: 14, kind: input, shape index: {}]
  %s15 = inlined_call_operand.hbm [shape: f32[32,128], index: 15, kind: input, shape index: {}]
  %s16 = inlined_call_operand.vmem [shape: f32[1,128], index: 16, kind: input, shape index: {}]
  %s17 = inlined_call_operand.hbm [shape: f32[16,128], index: 17, kind: output, shape index: {}]
  %s18 = sld [smem:[#allocation0]]
  $region125: #{tpu_custom_call.1} parent=0
    _
  %s20 = ssub.s32 1, %s18
  %s21 = scalar_select 0, %s20, %s18
  $region1: #{tpu_custom_call.1} parent=0
    #allocation3 [shape = 'u8[1024]{0}', space=vmem, size = 0x400, scoped, tag = 'input window, operand 2, single buffered']
    #allocation4 [shape = 's32[2]{0}', space=sflag, size = 0x8, scoped, tag = 'scoped memory for tpu_custom_call.1']
    #allocation5 [shape = 's32[2]{0}', space=sflag, size = 0x8, scoped, tag = 'scoped memory for tpu_custom_call.1']
    #allocation6 [shape = 'u8[1024]{0}', space=vmem, size = 0x400, scoped, tag = 'input window, operand 8']
    #allocation7 [shape = 's32[2]{0}', space=sflag, size = 0x8, scoped, tag = 'scoped memory for tpu_custom_call.1']
    #allocation8 [shape = 'u8[1024]{0}', space=vmem, size = 0x400, scoped, tag = 'input window, operand 14']
    #allocation9 [shape = 'u8[16384]{0}', space=vmem, size = 0x4000, scoped, tag = 'input window, operand 15, single buffered']
    #allocation10 [shape = 's32[1]{0}', space=sflag, size = 0x4, scoped, tag = 'scoped memory for tpu_custom_call.1']
    #allocation11 [shape = 'u8[8192]{0}', space=vmem, size = 0x2000, scoped, tag = 'output window, operand 0, single buffered']
    %22 = vsyncpa [#allocation4], 0
    %23 = vsyncpa [#allocation7], 0
    %s24 = scalar_lea.sflag [#allocation7], 1
    %25 = vsyncpa %s24, 0
    %26 = vsyncpa [#allocation10], 0
    %27 = vsyncpa [#allocation5], 0
    loop: start=0, step=1, limit=4
    $region2: #{tpu_custom_call.1} parent=1 // loop_pre_header
      _
    $region3: #{tpu_custom_call.1} parent=1 // loop_header
      %s29 = sphi 0, %s33
      %p30 = scmp.ge.s32.totalorder %s29, 4
      %s36 = sphi 0, %s48
      %s37 = sphi 0, %s44
      %s38 = sphi 0, %s36
      %s39 = sphi 0, %s37
      %s40 = sphi 0, %s38
      %s41 = sphi 0, %s39
      %s51 = sphi 0, %s53
      %s54 = sphi 0, %s51
      %s55 = sphi 0, %s54
      %s71 = sphi 0, %s55
      %s77 = sphi 0, %s79
      %s80 = sphi 0, %s77
      %s81 = sphi 0, %s80
      %s97 = sphi 0, %s81
      %s103 = sphi 0, %s105
      %s106 = sphi 0, %s103
      %s107 = sphi 0, %s106
      %s123 = sphi 0, %s107
      %s129 = sphi 0, %s131
      %s132 = sphi 0, %s129
      %s133 = sphi 0, %s132
      %s149 = sphi 0, %s133
      %s155 = sphi 0, %s157
      %s158 = sphi 0, %s155
      %s159 = sphi 0, %s158
      %s175 = sphi 0, %s159
      %s181 = sphi 0, %s183
      %s184 = sphi 0, %s181
      %s185 = sphi 0, %s184
      %s201 = sphi 0, %s185
      %s207 = sphi 0, %s209
      %s210 = sphi 0, %s207
      %s211 = sphi 0, %s210
      %s227 = sphi 0, %s211
      %s233 = sphi 0, %s235
      %s236 = sphi 0, %s233
      %s237 = sphi 0, %s236
      %s253 = sphi 0, %s237
      %s259 = sphi 0, %s261
      %s262 = sphi 0, %s259
      %s263 = sphi 0, %s262
      %s279 = sphi 0, %s263
      %s285 = sphi 0, %s287
      %s288 = sphi 0, %s285
      %s289 = sphi 0, %s288
      %s305 = sphi 0, %s289
      %s311 = sphi 0, %s313
      %s314 = sphi 0, %s311
      %s315 = sphi 0, %s314
      %s331 = sphi 0, %s315
      %s337 = sphi 0, %s339
      %s340 = sphi 0, %s337
      %s341 = sphi 0, %s340
      %s357 = sphi 0, %s341
      %s363 = sphi 0, %s365
      %s366 = sphi 0, %s363
      %s367 = sphi 0, %s366
      %s383 = sphi 0, %s367
      %s389 = sphi 0, %s391
      %s392 = sphi 0, %s389
      %s393 = sphi 0, %s392
      %s409 = sphi 0, %s393
      %s415 = sphi 0, %s417
      %s418 = sphi 0, %s415
      %s419 = sphi 0, %s418
      %s435 = sphi 0, %s419
      %s439 = sphi 0, %s439
      %s441 = sphi 0, %s439
      %s442 = sphi 0, %s441
      %s456 = sphi 0, %s442
      %s460 = sphi 0, %s460
      %s462 = sphi 0, %s460
      %s463 = sphi 0, %s462
      %s477 = sphi 0, %s463
      %s483 = sphi 0, %s485
      %s486 = sphi 0, %s483
      %s487 = sphi 0, %s486
      %s503 = sphi 0, %s487
    $region4: #{tpu_custom_call.1} parent=1 // loop_header_branch
      %32 = sbr.rel (%p30) target = $region8
    $region5: #{tpu_custom_call.1} parent=1 // loop_body
      %s34 = ssub.s32 %s29, 1
      %s35 = ssub.s32 %s29, 2
      %s42 = sadd.s32 1, %s37
      %p43 = scmp.ge.s32.totalorder %s42, 2
      %s44 = scalar_select %p43, 0, %s42
      %s45 = sadd.s32 1, %s36
      %s46 = scalar_select %p43, %s45, %s36
      %p47 = scmp.ge.s32.totalorder %s46, 1
      %s48 = scalar_select %p47, 0, %s46
      %s49 = ssub.s32 %s36, %s48
      %p50 = scmp.eq.s32.totalorder %s49, 0
      %s52 = sadd.s32 %s51, 1
      %s53 = scalar_select %p50, %s51, %s52
      %p56 = pneg %p50
      %p57 = scmp.eq.s32.totalorder %s29, 1
      %p58 = por %p56, %p57
      %p59 = scmp.ne.s32.totalorder %s51, %s54
      %p60 = scmp.eq.s32.totalorder %s29, 0
      %p61 = por %p59, %p60
      %p62 = scmp.ne.s32.totalorder %s51, %s54
      %p63 = scmp.eq.s32.totalorder %s34, 1
      %p64 = por %p62, %p63
      %p65 = scmp.ne.s32.totalorder %s54, %s55
      %p66 = scmp.eq.s32.totalorder %s34, 0
      %p67 = por %p65, %p66
      %p68 = scmp.ne.s32.totalorder %s54, %s55
      %p69 = scmp.eq.s32.totalorder %s35, 1
      %p70 = por %p68, %p69
      %p72 = scmp.ne.s32.totalorder %s55, %s71
      %p73 = scmp.eq.s32.totalorder %s35, 0
      %p74 = por %p72, %p73
      %s75 = ssub.s32 %s36, %s48
      %p76 = scmp.eq.s32.totalorder %s75, 0
      %s78 = sadd.s32 %s77, 1
      %s79 = scalar_select %p76, %s77, %s78
      %p82 = pneg %p76
      %p83 = scmp.eq.s32.totalorder %s29, 1
      %p84 = por %p82, %p83
      %p85 = scmp.ne.s32.totalorder %s77, %s80
      %p86 = scmp.eq.s32.totalorder %s29, 0
      %p87 = por %p85, %p86
      %p88 = scmp.ne.s32.totalorder %s77, %s80
      %p89 = scmp.eq.s32.totalorder %s34, 1
      %p90 = por %p88, %p89
      %p91 = scmp.ne.s32.totalorder %s80, %s81
      %p92 = scmp.eq.s32.totalorder %s34, 0
      %p93 = por %p91, %p92
      %p94 = scmp.ne.s32.totalorder %s80, %s81
      %p95 = scmp.eq.s32.totalorder %s35, 1
      %p96 = por %p94, %p95
      %p98 = scmp.ne.s32.totalorder %s81, %s97
      %p99 = scmp.eq.s32.totalorder %s35, 0
      %p100 = por %p98, %p99
      %s101 = ssub.s32 %s36, %s48
      %p102 = scmp.eq.s32.totalorder %s101, 0
      %s104 = sadd.s32 %s103, 1
      %s105 = scalar_select %p102, %s103, %s104
      %p108 = pneg %p102
      %p109 = scmp.eq.s32.totalorder %s29, 1
      %p110 = por %p108, %p109
      %p111 = scmp.ne.s32.totalorder %s103, %s106
      %p112 = scmp.eq.s32.totalorder %s29, 0
      %p113 = por %p111, %p112
      %p114 = scmp.ne.s32.totalorder %s103, %s106
      %p115 = scmp.eq.s32.totalorder %s34, 1
      %p116 = por %p114, %p115
      %p117 = scmp.ne.s32.totalorder %s106, %s107
      %p118 = scmp.eq.s32.totalorder %s34, 0
      %p119 = por %p117, %p118
      %p120 = scmp.ne.s32.totalorder %s106, %s107
      %p121 = scmp.eq.s32.totalorder %s35, 1
      %p122 = por %p120, %p121
      %p124 = scmp.ne.s32.totalorder %s107, %s123
      %p125 = scmp.eq.s32.totalorder %s35, 0
      %p126 = por %p124, %p125
      %s127 = ssub.s32 %s37, %s44
      %p128 = scmp.eq.s32.totalorder %s127, 0
      %s130 = sadd.s32 %s129, 1
      %s131 = scalar_select %p128, %s129, %s130
      %p134 = pneg %p128
      %p135 = scmp.eq.s32.totalorder %s29, 1
      %p136 = por %p134, %p135
      %p137 = scmp.ne.s32.totalorder %s129, %s132
      %p138 = scmp.eq.s32.totalorder %s29, 0
      %p139 = por %p137, %p138
      %p140 = scmp.ne.s32.totalorder %s129, %s132
      %p141 = scmp.eq.s32.totalorder %s34, 1
      %p142 = por %p140, %p141
      %p143 = scmp.ne.s32.totalorder %s132, %s133
      %p144 = scmp.eq.s32.totalorder %s34, 0
      %p145 = por %p143, %p144
      %p146 = scmp.ne.s32.totalorder %s132, %s133
      %p147 = scmp.eq.s32.totalorder %s35, 1
      %p148 = por %p146, %p147
      %p150 = scmp.ne.s32.totalorder %s133, %s149
      %p151 = scmp.eq.s32.totalorder %s35, 0
      %p152 = por %p150, %p151
      %s153 = ssub.s32 %s37, %s44
      %p154 = scmp.eq.s32.totalorder %s153, 0
      %s156 = sadd.s32 %s155, 1
      %s157 = scalar_select %p154, %s155, %s156
      %p160 = pneg %p154
      %p161 = scmp.eq.s32.totalorder %s29, 1
      %p162 = por %p160, %p161
      %p163 = scmp.ne.s32.totalorder %s155, %s158
      %p164 = scmp.eq.s32.totalorder %s29, 0
      %p165 = por %p163, %p164
      %p166 = scmp.ne.s32.totalorder %s155, %s158
      %p167 = scmp.eq.s32.totalorder %s34, 1
      %p168 = por %p166, %p167
      %p169 = scmp.ne.s32.totalorder %s158, %s159
      %p170 = scmp.eq.s32.totalorder %s34, 0
      %p171 = por %p169, %p170
      %p172 = scmp.ne.s32.totalorder %s158, %s159
      %p173 = scmp.eq.s32.totalorder %s35, 1
      %p174 = por %p172, %p173
      %p176 = scmp.ne.s32.totalorder %s159, %s175
      %p177 = scmp.eq.s32.totalorder %s35, 0
      %p178 = por %p176, %p177
      %s179 = ssub.s32 %s37, %s44
      %p180 = scmp.eq.s32.totalorder %s179, 0
      %s182 = sadd.s32 %s181, 1
      %s183 = scalar_select %p180, %s181, %s182
      %p186 = pneg %p180
      %p187 = scmp.eq.s32.totalorder %s29, 1
      %p188 = por %p186, %p187
      %p189 = scmp.ne.s32.totalorder %s181, %s184
      %p190 = scmp.eq.s32.totalorder %s29, 0
      %p191 = por %p189, %p190
      %p192 = scmp.ne.s32.totalorder %s181, %s184
      %p193 = scmp.eq.s32.totalorder %s34, 1
      %p194 = por %p192, %p193
      %p195 = scmp.ne.s32.totalorder %s184, %s185
      %p196 = scmp.eq.s32.totalorder %s34, 0
      %p197 = por %p195, %p196
      %p198 = scmp.ne.s32.totalorder %s184, %s185
      %p199 = scmp.eq.s32.totalorder %s35, 1
      %p200 = por %p198, %p199
      %p202 = scmp.ne.s32.totalorder %s185, %s201
      %p203 = scmp.eq.s32.totalorder %s35, 0
      %p204 = por %p202, %p203
      %s205 = ssub.s32 %s37, %s44
      %p206 = scmp.eq.s32.totalorder %s205, 0
      %s208 = sadd.s32 %s207, 1
      %s209 = scalar_select %p206, %s207, %s208
      %p212 = pneg %p206
      %p213 = scmp.eq.s32.totalorder %s29, 1
      %p214 = por %p212, %p213
      %p215 = scmp.ne.s32.totalorder %s207, %s210
      %p216 = scmp.eq.s32.totalorder %s29, 0
      %p217 = por %p215, %p216
      %p218 = scmp.ne.s32.totalorder %s207, %s210
      %p219 = scmp.eq.s32.totalorder %s34, 1
      %p220 = por %p218, %p219
      %p221 = scmp.ne.s32.totalorder %s210, %s211
      %p222 = scmp.eq.s32.totalorder %s34, 0
      %p223 = por %p221, %p222
      %p224 = scmp.ne.s32.totalorder %s210, %s211
      %p225 = scmp.eq.s32.totalorder %s35, 1
      %p226 = por %p224, %p225
      %p228 = scmp.ne.s32.totalorder %s211, %s227
      %p229 = scmp.eq.s32.totalorder %s35, 0
      %p230 = por %p228, %p229
      %s231 = ssub.s32 %s37, %s44
      %p232 = scmp.eq.s32.totalorder %s231, 0
      %s234 = sadd.s32 %s233, 1
      %s235 = scalar_select %p232, %s233, %s234
      %p238 = pneg %p232
      %p239 = scmp.eq.s32.totalorder %s29, 1
      %p240 = por %p238, %p239
      %p241 = scmp.ne.s32.totalorder %s233, %s236
      %p242 = scmp.eq.s32.totalorder %s29, 0
      %p243 = por %p241, %p242
      %p244 = scmp.ne.s32.totalorder %s233, %s236
      %p245 = scmp.eq.s32.totalorder %s34, 1
      %p246 = por %p244, %p245
      %p247 = scmp.ne.s32.totalorder %s236, %s237
      %p248 = scmp.eq.s32.totalorder %s34, 0
      %p249 = por %p247, %p248
      %p250 = scmp.ne.s32.totalorder %s236, %s237
      %p251 = scmp.eq.s32.totalorder %s35, 1
      %p252 = por %p250, %p251
      %p254 = scmp.ne.s32.totalorder %s237, %s253
      %p255 = scmp.eq.s32.totalorder %s35, 0
      %p256 = por %p254, %p255
      %s257 = ssub.s32 %s37, %s44
      %p258 = scmp.eq.s32.totalorder %s257, 0
      %s260 = sadd.s32 %s259, 1
      %s261 = scalar_select %p258, %s259, %s260
      %p264 = pneg %p258
      %p265 = scmp.eq.s32.totalorder %s29, 1
      %p266 = por %p264, %p265
      %p267 = scmp.ne.s32.totalorder %s259, %s262
      %p268 = scmp.eq.s32.totalorder %s29, 0
      %p269 = por %p267, %p268
      %p270 = scmp.ne.s32.totalorder %s259, %s262
      %p271 = scmp.eq.s32.totalorder %s34, 1
      %p272 = por %p270, %p271
      %p273 = scmp.ne.s32.totalorder %s262, %s263
      %p274 = scmp.eq.s32.totalorder %s34, 0
      %p275 = por %p273, %p274
      %p276 = scmp.ne.s32.totalorder %s262, %s263
      %p277 = scmp.eq.s32.totalorder %s35, 1
      %p278 = por %p276, %p277
      %p280 = scmp.ne.s32.totalorder %s263, %s279
      %p281 = scmp.eq.s32.totalorder %s35, 0
      %p282 = por %p280, %p281
      %s283 = ssub.s32 %s37, %s44
      %p284 = scmp.eq.s32.totalorder %s283, 0
      %s286 = sadd.s32 %s285, 1
      %s287 = scalar_select %p284, %s285, %s286
      %p290 = pneg %p284
      %p291 = scmp.eq.s32.totalorder %s29, 1
      %p292 = por %p290, %p291
      %p293 = scmp.ne.s32.totalorder %s285, %s288
      %p294 = scmp.eq.s32.totalorder %s29, 0
      %p295 = por %p293, %p294
      %p296 = scmp.ne.s32.totalorder %s285, %s288
      %p297 = scmp.eq.s32.totalorder %s34, 1
      %p298 = por %p296, %p297
      %p299 = scmp.ne.s32.totalorder %s288, %s289
      %p300 = scmp.eq.s32.totalorder %s34, 0
      %p301 = por %p299, %p300
      %p302 = scmp.ne.s32.totalorder %s288, %s289
      %p303 = scmp.eq.s32.totalorder %s35, 1
      %p304 = por %p302, %p303
      %p306 = scmp.ne.s32.totalorder %s289, %s305
      %p307 = scmp.eq.s32.totalorder %s35, 0
      %p308 = por %p306, %p307
      %s309 = ssub.s32 %s37, %s44
      %p310 = scmp.eq.s32.totalorder %s309, 0
      %s312 = sadd.s32 %s311, 1
      %s313 = scalar_select %p310, %s311, %s312
      %p316 = pneg %p310
      %p317 = scmp.eq.s32.totalorder %s29, 1
      %p318 = por %p316, %p317
      %p319 = scmp.ne.s32.totalorder %s311, %s314
      %p320 = scmp.eq.s32.totalorder %s29, 0
      %p321 = por %p319, %p320
      %p322 = scmp.ne.s32.totalorder %s311, %s314
      %p323 = scmp.eq.s32.totalorder %s34, 1
      %p324 = por %p322, %p323
      %p325 = scmp.ne.s32.totalorder %s314, %s315
      %p326 = scmp.eq.s32.totalorder %s34, 0
      %p327 = por %p325, %p326
      %p328 = scmp.ne.s32.totalorder %s314, %s315
      %p329 = scmp.eq.s32.totalorder %s35, 1
      %p330 = por %p328, %p329
      %p332 = scmp.ne.s32.totalorder %s315, %s331
      %p333 = scmp.eq.s32.totalorder %s35, 0
      %p334 = por %p332, %p333
      %s335 = ssub.s32 %s37, %s44
      %p336 = scmp.eq.s32.totalorder %s335, 0
      %s338 = sadd.s32 %s337, 1
      %s339 = scalar_select %p336, %s337, %s338
      %p342 = pneg %p336
      %p343 = scmp.eq.s32.totalorder %s29, 1
      %p344 = por %p342, %p343
      %p345 = scmp.ne.s32.totalorder %s337, %s340
      %p346 = scmp.eq.s32.totalorder %s29, 0
      %p347 = por %p345, %p346
      %p348 = scmp.ne.s32.totalorder %s337, %s340
      %p349 = scmp.eq.s32.totalorder %s34, 1
      %p350 = por %p348, %p349
      %p351 = scmp.ne.s32.totalorder %s340, %s341
      %p352 = scmp.eq.s32.totalorder %s34, 0
      %p353 = por %p351, %p352
      %p354 = scmp.ne.s32.totalorder %s340, %s341
      %p355 = scmp.eq.s32.totalorder %s35, 1
      %p356 = por %p354, %p355
      %p358 = scmp.ne.s32.totalorder %s341, %s357
      %p359 = scmp.eq.s32.totalorder %s35, 0
      %p360 = por %p358, %p359
      %s361 = ssub.s32 %s37, %s44
      %p362 = scmp.eq.s32.totalorder %s361, 0
      %s364 = sadd.s32 %s363, 1
      %s365 = scalar_select %p362, %s363, %s364
      %p368 = pneg %p362
      %p369 = scmp.eq.s32.totalorder %s29, 1
      %p370 = por %p368, %p369
      %p371 = scmp.ne.s32.totalorder %s363, %s366
      %p372 = scmp.eq.s32.totalorder %s29, 0
      %p373 = por %p371, %p372
      %p374 = scmp.ne.s32.totalorder %s363, %s366
      %p375 = scmp.eq.s32.totalorder %s34, 1
      %p376 = por %p374, %p375
      %p377 = scmp.ne.s32.totalorder %s366, %s367
      %p378 = scmp.eq.s32.totalorder %s34, 0
      %p379 = por %p377, %p378
      %p380 = scmp.ne.s32.totalorder %s366, %s367
      %p381 = scmp.eq.s32.totalorder %s35, 1
      %p382 = por %p380, %p381
      %p384 = scmp.ne.s32.totalorder %s367, %s383
      %p385 = scmp.eq.s32.totalorder %s35, 0
      %p386 = por %p384, %p385
      %s387 = ssub.s32 %s37, %s44
      %p388 = scmp.eq.s32.totalorder %s387, 0
      %s390 = sadd.s32 %s389, 1
      %s391 = scalar_select %p388, %s389, %s390
      %p394 = pneg %p388
      %p395 = scmp.eq.s32.totalorder %s29, 1
      %p396 = por %p394, %p395
      %p397 = scmp.ne.s32.totalorder %s389, %s392
      %p398 = scmp.eq.s32.totalorder %s29, 0
      %p399 = por %p397, %p398
      %p400 = scmp.ne.s32.totalorder %s389, %s392
      %p401 = scmp.eq.s32.totalorder %s34, 1
      %p402 = por %p400, %p401
      %p403 = scmp.ne.s32.totalorder %s392, %s393
      %p404 = scmp.eq.s32.totalorder %s34, 0
      %p405 = por %p403, %p404
      %p406 = scmp.ne.s32.totalorder %s392, %s393
      %p407 = scmp.eq.s32.totalorder %s35, 1
      %p408 = por %p406, %p407
      %p410 = scmp.ne.s32.totalorder %s393, %s409
      %p411 = scmp.eq.s32.totalorder %s35, 0
      %p412 = por %p410, %p411
      %s413 = ssub.s32 %s37, %s44
      %p414 = scmp.eq.s32.totalorder %s413, 0
      %s416 = sadd.s32 %s415, 1
      %s417 = scalar_select %p414, %s415, %s416
      %p420 = pneg %p414
      %p421 = scmp.eq.s32.totalorder %s29, 1
      %p422 = por %p420, %p421
      %p423 = scmp.ne.s32.totalorder %s415, %s418
      %p424 = scmp.eq.s32.totalorder %s29, 0
      %p425 = por %p423, %p424
      %p426 = scmp.ne.s32.totalorder %s415, %s418
      %p427 = scmp.eq.s32.totalorder %s34, 1
      %p428 = por %p426, %p427
      %p429 = scmp.ne.s32.totalorder %s418, %s419
      %p430 = scmp.eq.s32.totalorder %s34, 0
      %p431 = por %p429, %p430
      %p432 = scmp.ne.s32.totalorder %s418, %s419
      %p433 = scmp.eq.s32.totalorder %s35, 1
      %p434 = por %p432, %p433
      %p436 = scmp.ne.s32.totalorder %s419, %s435
      %p437 = scmp.eq.s32.totalorder %s35, 0
      %p438 = por %p436, %p437
      %s440 = sadd.s32 %s439, 1
      %p443 = scmp.eq.s32.totalorder %s29, 1
      %p444 = scmp.ne.s32.totalorder %s439, %s441
      %p445 = scmp.eq.s32.totalorder %s29, 0
      %p446 = por %p444, %p445
      %p447 = scmp.ne.s32.totalorder %s439, %s441
      %p448 = scmp.eq.s32.totalorder %s34, 1
      %p449 = por %p447, %p448
      %p450 = scmp.ne.s32.totalorder %s441, %s442
      %p451 = scmp.eq.s32.totalorder %s34, 0
      %p452 = por %p450, %p451
      %p453 = scmp.ne.s32.totalorder %s441, %s442
      %p454 = scmp.eq.s32.totalorder %s35, 1
      %p455 = por %p453, %p454
      %p457 = scmp.ne.s32.totalorder %s442, %s456
      %p458 = scmp.eq.s32.totalorder %s35, 0
      %p459 = por %p457, %p458
      %s461 = sadd.s32 %s460, 1
      %p464 = scmp.eq.s32.totalorder %s29, 1
      %p465 = scmp.ne.s32.totalorder %s460, %s462
      %p466 = scmp.eq.s32.totalorder %s29, 0
      %p467 = por %p465, %p466
      %p468 = scmp.ne.s32.totalorder %s460, %s462
      %p469 = scmp.eq.s32.totalorder %s34, 1
      %p470 = por %p468, %p469
      %p471 = scmp.ne.s32.totalorder %s462, %s463
      %p472 = scmp.eq.s32.totalorder %s34, 0
      %p473 = por %p471, %p472
      %p474 = scmp.ne.s32.totalorder %s462, %s463
      %p475 = scmp.eq.s32.totalorder %s35, 1
      %p476 = por %p474, %p475
      %p478 = scmp.ne.s32.totalorder %s463, %s477
      %p479 = scmp.eq.s32.totalorder %s35, 0
      %p480 = por %p478, %p479
      %s481 = ssub.s32 %s36, %s48
      %p482 = scmp.eq.s32.totalorder %s481, 0
      %s484 = sadd.s32 %s483, 1
      %s485 = scalar_select %p482, %s483, %s484
      %p488 = pneg %p482
      %p489 = scmp.eq.s32.totalorder %s29, 1
      %p490 = por %p488, %p489
      %p491 = scmp.ne.s32.totalorder %s483, %s486
      %p492 = scmp.eq.s32.totalorder %s29, 0
      %p493 = por %p491, %p492
      %p494 = scmp.ne.s32.totalorder %s483, %s486
      %p495 = scmp.eq.s32.totalorder %s34, 1
      %p496 = por %p494, %p495
      %p497 = scmp.ne.s32.totalorder %s486, %s487
      %p498 = scmp.eq.s32.totalorder %s34, 0
      %p499 = por %p497, %p498
      %p500 = scmp.ne.s32.totalorder %s486, %s487
      %p501 = scmp.eq.s32.totalorder %s35, 1
      %p502 = por %p500, %p501
      %p504 = scmp.ne.s32.totalorder %s487, %s503
      %p505 = scmp.eq.s32.totalorder %s35, 0
      %p506 = por %p504, %p505
      %p507 = scmp.le.s32.totalorder 1, %s29
      %p508 = scmp.lt.s32.totalorder %s29, 3
      %p509 = pnand %p507, %p508
      %p510 = pneg %p509
      // Predicated region
      $region9: #{tpu_custom_call.1} parent=5 // pred_check
        _
      $region10: #{tpu_custom_call.1} parent=5 // pred_check_branch
        %512 = sbr.rel (%p509) target = $region12
      $region11: #{tpu_custom_call.1} parent=5 // pred_region
        %s513 = ssub.s32 %s29, 1
        // Predicated region
        $region13: #{tpu_custom_call.1} parent=11 // pred_check
          %p514 = pneg %p67
        $region14: #{tpu_custom_call.1} parent=11 // pred_check_branch
          %516 = sbr.rel (%p514) target = $region16
        $region15: #{tpu_custom_call.1} parent=11 // pred_region
          %s517 = smul.u32 2, %s38
          %p518 = scmp.lt.s32.totalorder %s517, 1
          %s519 = scalar_select %p518, %s517, 1
          %s520 = smul.addr %s519, 8
          %s521 = scalar_lea.vmem %s0, %s520
          %s522 = smul.u32 2, %s38
        $region16: #{tpu_custom_call.1} parent=11 // pred_fallthru
          _
        // Predicated region
        $region17: #{tpu_custom_call.1} parent=11 // pred_check
          %p523 = pneg %p93
        $region18: #{tpu_custom_call.1} parent=11 // pred_check_branch
          %525 = sbr.rel (%p523) target = $region20
        $region19: #{tpu_custom_call.1} parent=11 // pred_region
          %s526 = smul.u32 2, %s38
          %p527 = scmp.lt.s32.totalorder %s526, 1
          %s528 = scalar_select %p527, %s526, 1
          %s529 = smul.addr %s528, 8
          %s530 = scalar_lea.vmem %s1, %s529
          %s531 = smul.u32 2, %s38
        $region20: #{tpu_custom_call.1} parent=11 // pred_fallthru
          _
        // Predicated region
        $region21: #{tpu_custom_call.1} parent=11 // pred_check
          %p532 = pneg %p119
        $region22: #{tpu_custom_call.1} parent=11 // pred_check_branch
          %534 = sbr.rel (%p532) target = $region24
        $region23: #{tpu_custom_call.1} parent=11 // pred_region
          %s535 = smul.u32 2, %s38
          %537 = vsyncadd [#allocation4], 0
          %s538 = scalar_lea.hbm %s2, %s535
          %s539 = sshll.u32 %s538, 4
          %s540 = int_to_ptr.hbm [resolvable:$true] %s539
          %s541 = sshll.u32 [#allocation3], 4
          %s542 = int_to_ptr.vmem [resolvable:$true] %s541
          %547 = dma.hbm_to_vmem [thread:$0]  %s540, 32, %s542, [#allocation4], 16, 16, 1
        $region24: #{tpu_custom_call.1} parent=11 // pred_fallthru
          _
        // Predicated region
        $region25: #{tpu_custom_call.1} parent=11 // pred_check
          %p548 = pneg %p452
        $region26: #{tpu_custom_call.1} parent=11 // pred_check_branch
          %550 = sbr.rel (%p548) target = $region28
        $region27: #{tpu_custom_call.1} parent=11 // pred_region
          %552 = vsyncadd [#allocation10], 0
          %s553 = sshll.u32 %s15, 4
          %s554 = int_to_ptr.hbm [resolvable:$true] %s553
          %s555 = sshll.u32 [#allocation9], 4
          %s556 = int_to_ptr.vmem [resolvable:$true] %s555
          %561 = dma.hbm_to_vmem [thread:$0]  %s554, 512, %s556, [#allocation10], 128, 128, 8
        $region28: #{tpu_custom_call.1} parent=11 // pred_fallthru
          _
        // Predicated region
        $region29: #{tpu_custom_call.1} parent=11 // pred_check
          %p562 = pneg %p473
        $region30: #{tpu_custom_call.1} parent=11 // pred_check_branch
          %564 = sbr.rel (%p562) target = $region32
        $region31: #{tpu_custom_call.1} parent=11 // pred_region
          _
        $region32: #{tpu_custom_call.1} parent=11 // pred_fallthru
          _
      $region12: #{tpu_custom_call.1} parent=5 // pred_fallthru
        _
      %p565 = scmp.lt.s32.totalorder %s29, 2
      // Predicated region
      $region33: #{tpu_custom_call.1} parent=5 // pred_check
        %p566 = pneg %p565
      $region34: #{tpu_custom_call.1} parent=5 // pred_check_branch
        %568 = sbr.rel (%p566) target = $region36
      $region35: #{tpu_custom_call.1} parent=5 // pred_region
        // Predicated region
        $region37: #{tpu_custom_call.1} parent=35 // pred_check
          %p569 = pneg %p139
        $region38: #{tpu_custom_call.1} parent=35 // pred_check_branch
          %571 = sbr.rel (%p569) target = $region40
        $region39: #{tpu_custom_call.1} parent=35 // pred_region
          %p572 = scmp.lt.s32.totalorder %s37, 1
          %s573 = scalar_select %p572, %s37, 1
          %s574 = smul.addr %s573, 4
          %s575 = smul.addr %s574, 8
          %s576 = scalar_lea.vmem %s3, %s575
        $region40: #{tpu_custom_call.1} parent=35 // pred_fallthru
          _
        // Predicated region
        $region41: #{tpu_custom_call.1} parent=35 // pred_check
          %p577 = pneg %p165
        $region42: #{tpu_custom_call.1} parent=35 // pred_check_branch
          %579 = sbr.rel (%p577) target = $region44
        $region43: #{tpu_custom_call.1} parent=35 // pred_region
          %p580 = scmp.lt.s32.totalorder %s37, 1
          %s581 = scalar_select %p580, %s37, 1
          %s582 = scalar_lea.vmem %s4, %s581
        $region44: #{tpu_custom_call.1} parent=35 // pred_fallthru
          _
        // Predicated region
        $region45: #{tpu_custom_call.1} parent=35 // pred_check
          %p583 = pneg %p191
        $region46: #{tpu_custom_call.1} parent=35 // pred_check_branch
          %585 = sbr.rel (%p583) target = $region48
        $region47: #{tpu_custom_call.1} parent=35 // pred_region
          %p586 = scmp.lt.s32.totalorder %s37, 1
          %s587 = scalar_select %p586, %s37, 1
          %s588 = smul.addr %s587, 4
          %s589 = smul.addr %s588, 8
          %s590 = scalar_lea.vmem %s5, %s589
        $region48: #{tpu_custom_call.1} parent=35 // pred_fallthru
          _
        // Predicated region
        $region49: #{tpu_custom_call.1} parent=35 // pred_check
          %p591 = pneg %p217
        $region50: #{tpu_custom_call.1} parent=35 // pred_check_branch
          %593 = sbr.rel (%p591) target = $region52
        $region51: #{tpu_custom_call.1} parent=35 // pred_region
          %p594 = scmp.lt.s32.totalorder %s37, 1
          %s595 = scalar_select %p594, %s37, 1
          %s596 = scalar_lea.vmem %s6, %s595
        $region52: #{tpu_custom_call.1} parent=35 // pred_fallthru
          _
        // Predicated region
        $region53: #{tpu_custom_call.1} parent=35 // pred_check
          %p597 = pneg %p243
        $region54: #{tpu_custom_call.1} parent=35 // pred_check_branch
          %599 = sbr.rel (%p597) target = $region56
        $region55: #{tpu_custom_call.1} parent=35 // pred_region
          %p600 = scmp.lt.s32.totalorder %s37, 1
          %s601 = scalar_select %p600, %s37, 1
          %s602 = scalar_lea.vmem %s7, %s601
        $region56: #{tpu_custom_call.1} parent=35 // pred_fallthru
          _
        // Predicated region
        $region57: #{tpu_custom_call.1} parent=35 // pred_check
          %p603 = pneg %p269
        $region58: #{tpu_custom_call.1} parent=35 // pred_check_branch
          %605 = sbr.rel (%p603) target = $region60
        $region59: #{tpu_custom_call.1} parent=35 // pred_region
          %s606 = sand.u32 %s29, 1
          %s607 = scalar_lea.sflag [#allocation7], %s606
          %s608 = sand.u32 %s259, 1
          %s609 = scalar_lea.vmem [#allocation6], %s608
          %611 = vsyncadd %s607, 0
          %s612 = scalar_lea.hbm %s8, %s37
          %s614 = sshll.u32 %s612, 4
          %s615 = int_to_ptr.hbm [resolvable:$true] %s614
          %s616 = sshll.u32 %s609, 4
          %s617 = int_to_ptr.vmem [resolvable:$true] %s616
          %619 = dma.hbm_to_vmem [thread:$0]  %s615, 16, %s617, %s607
        $region60: #{tpu_custom_call.1} parent=35 // pred_fallthru
          _
        // Predicated region
        $region61: #{tpu_custom_call.1} parent=35 // pred_check
          %p620 = pneg %p295
        $region62: #{tpu_custom_call.1} parent=35 // pred_check_branch
          %622 = sbr.rel (%p620) target = $region64
        $region63: #{tpu_custom_call.1} parent=35 // pred_region
          %p623 = scmp.lt.s32.totalorder %s37, 1
          %s624 = scalar_select %p623, %s37, 1
          %s625 = smul.addr %s624, 4
          %s626 = smul.addr %s625, 8
          %s627 = scalar_lea.vmem %s9, %s626
        $region64: #{tpu_custom_call.1} parent=35 // pred_fallthru
          _
        // Predicated region
        $region65: #{tpu_custom_call.1} parent=35 // pred_check
          %p628 = pneg %p321
        $region66: #{tpu_custom_call.1} parent=35 // pred_check_branch
          %630 = sbr.rel (%p628) target = $region68
        $region67: #{tpu_custom_call.1} parent=35 // pred_region
          %p631 = scmp.lt.s32.totalorder %s37, 1
          %s632 = scalar_select %p631, %s37, 1
          %s633 = scalar_lea.vmem %s10, %s632
        $region68: #{tpu_custom_call.1} parent=35 // pred_fallthru
          _
        // Predicated region
        $region69: #{tpu_custom_call.1} parent=35 // pred_check
          %p634 = pneg %p347
        $region70: #{tpu_custom_call.1} parent=35 // pred_check_branch
          %636 = sbr.rel (%p634) target = $region72
        $region71: #{tpu_custom_call.1} parent=35 // pred_region
          %p637 = scmp.lt.s32.totalorder %s37, 1
          %s638 = scalar_select %p637, %s37, 1
          %s639 = smul.addr %s638, 8
          %s640 = smul.addr %s639, 8
          %s641 = scalar_lea.vmem %s11, %s640
        $region72: #{tpu_custom_call.1} parent=35 // pred_fallthru
          _
        // Predicated region
        $region73: #{tpu_custom_call.1} parent=35 // pred_check
          %p642 = pneg %p373
        $region74: #{tpu_custom_call.1} parent=35 // pred_check_branch
          %644 = sbr.rel (%p642) target = $region76
        $region75: #{tpu_custom_call.1} parent=35 // pred_region
          %p645 = scmp.lt.s32.totalorder %s37, 1
          %s646 = scalar_select %p645, %s37, 1
          %s647 = scalar_lea.vmem %s12, %s646
        $region76: #{tpu_custom_call.1} parent=35 // pred_fallthru
          _
        // Predicated region
        $region77: #{tpu_custom_call.1} parent=35 // pred_check
          %p648 = pneg %p399
        $region78: #{tpu_custom_call.1} parent=35 // pred_check_branch
          %650 = sbr.rel (%p648) target = $region80
        $region79: #{tpu_custom_call.1} parent=35 // pred_region
          %p651 = scmp.lt.s32.totalorder %s37, 1
          %s652 = scalar_select %p651, %s37, 1
          %s653 = scalar_lea.vmem %s13, %s652
        $region80: #{tpu_custom_call.1} parent=35 // pred_fallthru
          _
        // Predicated region
        $region81: #{tpu_custom_call.1} parent=35 // pred_check
          %p654 = pneg %p425
        $region82: #{tpu_custom_call.1} parent=35 // pred_check_branch
          %656 = sbr.rel (%p654) target = $region84
        $region83: #{tpu_custom_call.1} parent=35 // pred_region
          %s657 = sand.u32 %s29, 1
          %s658 = scalar_lea.sflag [#allocation7], %s657
          %s659 = sand.u32 %s415, 1
          %s660 = scalar_lea.vmem [#allocation8], %s659
          %662 = vsyncadd %s658, 0
          %s663 = scalar_lea.hbm %s14, %s37
          %s665 = sshll.u32 %s663, 4
          %s666 = int_to_ptr.hbm [resolvable:$true] %s665
          %s667 = sshll.u32 %s660, 4
          %s668 = int_to_ptr.vmem [resolvable:$true] %s667
          %670 = dma.hbm_to_vmem [thread:$0]  %s666, 16, %s668, %s658
        $region84: #{tpu_custom_call.1} parent=35 // pred_fallthru
          _
      $region36: #{tpu_custom_call.1} parent=5 // pred_fallthru
        _
      %p671 = scmp.le.s32.totalorder 1, %s29
      %p672 = scmp.lt.s32.totalorder %s29, 3
      %p673 = pnand %p671, %p672
      %p674 = pneg %p673
      // Predicated region
      $region85: #{tpu_custom_call.1} parent=5 // pred_check
        _
      $region86: #{tpu_custom_call.1} parent=5 // pred_check_branch
        %676 = sbr.rel (%p673) target = $region88
      $region87: #{tpu_custom_call.1} parent=5 // pred_region
        %s677 = ssub.s32 %s29, 1
        // Predicated region
        $region89: #{tpu_custom_call.1} parent=87 // pred_check
          %p678 = pneg %p119
        $region90: #{tpu_custom_call.1} parent=87 // pred_check_branch
          %680 = sbr.rel (%p678) target = $region92
        $region91: #{tpu_custom_call.1} parent=87 // pred_region
          %682 = dma.done [#allocation4], 32
        $region92: #{tpu_custom_call.1} parent=87 // pred_fallthru
          _
        %s683 = sand.u32 %s34, 1
        %s684 = scalar_lea.sflag [#allocation7], %s683
        %s685 = sand.u32 %s262, 1
        %s686 = scalar_lea.vmem [#allocation6], %s685
        // Predicated region
        $region93: #{tpu_custom_call.1} parent=87 // pred_check
          %p687 = pneg %p275
        $region94: #{tpu_custom_call.1} parent=87 // pred_check_branch
          %689 = sbr.rel (%p687) target = $region96
        $region95: #{tpu_custom_call.1} parent=87 // pred_region
          %691 = dma.done %s684, 16
        $region96: #{tpu_custom_call.1} parent=87 // pred_fallthru
          _
        %s692 = sand.u32 %s34, 1
        %s693 = scalar_lea.sflag [#allocation7], %s692
        %s694 = sand.u32 %s418, 1
        %s695 = scalar_lea.vmem [#allocation8], %s694
        // Predicated region
        $region97: #{tpu_custom_call.1} parent=87 // pred_check
          %p696 = pneg %p431
        $region98: #{tpu_custom_call.1} parent=87 // pred_check_branch
          %698 = sbr.rel (%p696) target = $region100
        $region99: #{tpu_custom_call.1} parent=87 // pred_region
          %700 = dma.done %s693, 16
        $region100: #{tpu_custom_call.1} parent=87 // pred_fallthru
          _
        // Predicated region
        $region101: #{tpu_custom_call.1} parent=87 // pred_check
          %p701 = pneg %p452
        $region102: #{tpu_custom_call.1} parent=87 // pred_check_branch
          %703 = sbr.rel (%p701) target = $region104
        $region103: #{tpu_custom_call.1} parent=87 // pred_region
          %705 = dma.done [#allocation10], 512
        $region104: #{tpu_custom_call.1} parent=87 // pred_fallthru
          _
        %s706 = smul.u32 2, %s38
        %p707 = scmp.lt.s32.totalorder %s706, 1
        %s708 = scalar_select %p707, %s706, 1
        %s709 = smul.addr %s708, 8
        %s710 = scalar_lea.vmem %s0, %s709
        %p711 = pneg %p67
        %p712 = pneg %p64
        %s713 = smul.u32 2, %s38
        %p714 = scmp.lt.s32.totalorder %s713, 1
        %s715 = scalar_select %p714, %s713, 1
        %s716 = smul.addr %s715, 8
        %s717 = scalar_lea.vmem %s1, %s716
        %p718 = pneg %p93
        %p719 = pneg %p90
        %p720 = pneg %p119
        %p721 = pneg %p116
        %p722 = scmp.lt.s32.totalorder %s39, 1
        %s723 = scalar_select %p722, %s39, 1
        %s724 = smul.addr %s723, 4
        %s725 = smul.addr %s724, 8
        %s726 = scalar_lea.vmem %s3, %s725
        %p727 = pneg %p145
        %p728 = pneg %p142
        %p729 = scmp.lt.s32.totalorder %s39, 1
        %s730 = scalar_select %p729, %s39, 1
        %s731 = scalar_lea.vmem %s4, %s730
        %p732 = pneg %p171
        %p733 = pneg %p168
        %p734 = scmp.lt.s32.totalorder %s39, 1
        %s735 = scalar_select %p734, %s39, 1
        %s736 = smul.addr %s735, 4
        %s737 = smul.addr %s736, 8
        %s738 = scalar_lea.vmem %s5, %s737
        %p739 = pneg %p197
        %p740 = pneg %p194
        %p741 = scmp.lt.s32.totalorder %s39, 1
        %s742 = scalar_select %p741, %s39, 1
        %s743 = scalar_lea.vmem %s6, %s742
        %p744 = pneg %p223
        %p745 = pneg %p220
        %p746 = scmp.lt.s32.totalorder %s39, 1
        %s747 = scalar_select %p746, %s39, 1
        %s748 = scalar_lea.vmem %s7, %s747
        %p749 = pneg %p249
        %p750 = pneg %p246
        %s751 = sand.u32 %s34, 1
        %s752 = scalar_lea.sflag [#allocation7], %s751
        %s753 = sand.u32 %s262, 1
        %s754 = scalar_lea.vmem [#allocation6], %s753
        %p755 = pneg %p275
        %p756 = pneg %p272
        %p757 = scmp.lt.s32.totalorder %s39, 1
        %s758 = scalar_select %p757, %s39, 1
        %s759 = smul.addr %s758, 4
        %s760 = smul.addr %s759, 8
        %s761 = scalar_lea.vmem %s9, %s760
        %p762 = pneg %p301
        %p763 = pneg %p298
        %p764 = scmp.lt.s32.totalorder %s39, 1
        %s765 = scalar_select %p764, %s39, 1
        %s766 = scalar_lea.vmem %s10, %s765
        %p767 = pneg %p327
        %p768 = pneg %p324
        %p769 = scmp.lt.s32.totalorder %s39, 1
        %s770 = scalar_select %p769, %s39, 1
        %s771 = smul.addr %s770, 8
        %s772 = smul.addr %s771, 8
        %s773 = scalar_lea.vmem %s11, %s772
        %p774 = pneg %p353
        %p775 = pneg %p350
        %p776 = scmp.lt.s32.totalorder %s39, 1
        %s777 = scalar_select %p776, %s39, 1
        %s778 = scalar_lea.vmem %s12, %s777
        %p779 = pneg %p379
        %p780 = pneg %p376
        %p781 = scmp.lt.s32.totalorder %s39, 1
        %s782 = scalar_select %p781, %s39, 1
        %s783 = scalar_lea.vmem %s13, %s782
        %p784 = pneg %p405
        %p785 = pneg %p402
        %s786 = sand.u32 %s34, 1
        %s787 = scalar_lea.sflag [#allocation7], %s786
        %s788 = sand.u32 %s418, 1
        %s789 = scalar_lea.vmem [#allocation8], %s788
        %p790 = pneg %p431
        %p791 = pneg %p428
        %p792 = pneg %p452
        %p793 = pneg %p449
        %p794 = pneg %p473
        %p795 = pneg %p470
        %p796 = pneg %p499
        %p797 = pneg %p496
        %s798 = smul.u32 2, %s38
        %p799 = scmp.lt.s32.totalorder %s798, 1
        %s800 = scalar_select %p799, %s798, 1
        %s801 = smul.addr %s800, 8
        %s802 = scalar_lea.vmem %s0, %s801
        %s803 = smul.u32 2, %s38
        %s804 = smul.u32 2, %s38
        %p805 = scmp.lt.s32.totalorder %s804, 1
        %s806 = scalar_select %p805, %s804, 1
        %s807 = smul.addr %s806, 8
        %s808 = scalar_lea.vmem %s1, %s807
        %s809 = smul.u32 2, %s38
        %s810 = smul.u32 2, %s38
        %p811 = scmp.lt.s32.totalorder %s39, 1
        %s812 = scalar_select %p811, %s39, 1
        %s813 = smul.addr %s812, 4
        %s814 = smul.addr %s813, 8
        %s815 = scalar_lea.vmem %s3, %s814
        %p816 = scmp.lt.s32.totalorder %s39, 1
        %s817 = scalar_select %p816, %s39, 1
        %s818 = scalar_lea.vmem %s4, %s817
        %p819 = scmp.lt.s32.totalorder %s39, 1
        %s820 = scalar_select %p819, %s39, 1
        %s821 = smul.addr %s820, 4
        %s822 = smul.addr %s821, 8
        %s823 = scalar_lea.vmem %s5, %s822
        %p824 = scmp.lt.s32.totalorder %s39, 1
        %s825 = scalar_select %p824, %s39, 1
        %s826 = scalar_lea.vmem %s6, %s825
        %p827 = scmp.lt.s32.totalorder %s39, 1
        %s828 = scalar_select %p827, %s39, 1
        %s829 = scalar_lea.vmem %s7, %s828
        %p830 = scmp.lt.s32.totalorder %s39, 1
        %s831 = scalar_select %p830, %s39, 1
        %s832 = smul.addr %s831, 4
        %s833 = smul.addr %s832, 8
        %s834 = scalar_lea.vmem %s9, %s833
        %p835 = scmp.lt.s32.totalorder %s39, 1
        %s836 = scalar_select %p835, %s39, 1
        %s837 = scalar_lea.vmem %s10, %s836
        %p838 = scmp.lt.s32.totalorder %s39, 1
        %s839 = scalar_select %p838, %s39, 1
        %s840 = smul.addr %s839, 8
        %s841 = smul.addr %s840, 8
        %s842 = scalar_lea.vmem %s11, %s841
        %p843 = scmp.lt.s32.totalorder %s39, 1
        %s844 = scalar_select %p843, %s39, 1
        %s845 = scalar_lea.vmem %s12, %s844
        %p846 = scmp.lt.s32.totalorder %s39, 1
        %s847 = scalar_select %p846, %s39, 1
        %s848 = scalar_lea.vmem %s13, %s847
        %s849 = smul.u32 2, %s38
        %p850 = scmp.eq.s32.totalorder %s39, 0
        // Predicated region
        $region105: #{tpu_custom_call.1} parent=87 // pred_check
          %p851 = pneg %p850
        $region106: #{tpu_custom_call.1} parent=87 // pred_check_branch
          %853 = sbr.rel (%p851) target = $region108
        $region107: #{tpu_custom_call.1} parent=87 // pred_region
          %v854 = vld [vmem:[%s802] sm:$0xff]
          %v855 = vld [vmem:[%s802 + $0x8] sm:$0xff]
          %vm856 = vcmask 261120
          %857 = vst.msk [vmem:[#allocation2] sm:$0xff] %vm856, %v854
          %858 = vst.msk [vmem:[#allocation2 + $0x8] sm:$0xff] %vm856, %v855
        $region108: #{tpu_custom_call.1} parent=87 // pred_fallthru
          _
        %v859 = vld [vmem:[#allocation2] sm:$0xff]
        %v860 = vld [vmem:[#allocation2 + $0x8] sm:$0xff]
        %v861 = vld [vmem:[%s808] sm:$0xff]
        %v862 = vld [vmem:[%s808 + $0x8] sm:$0xff]
        %v863 = vld [vmem:[#allocation3] sm:$0x1]
        %v864 = vld [vmem:[#allocation3 + $0x1] sm:$0x1]
        %v865 = vld [vmem:[%s815] sm:$0xff]
        %v866 = vld [vmem:[%s815 + $0x8] sm:$0xff]
        %v867 = vld [vmem:[%s815 + $0x10] sm:$0xff]
        %v868 = vld [vmem:[%s815 + $0x18] sm:$0xff]
        %v869 = vld [vmem:[%s818] sm:$0x1]
        %v871 = vperm.slane %v869, 0
        %vm873 = vcmask 261120
        %v875 = vsel %vm873, %v859, 0
        %v878 = vsel %vm873, %v860, 0
        %880 = vmatpush.msra.mxu0 0.0
        %881 = vmatpush.msra.mxu0 0.0
        %882 = vmatpush.msra.mxu0 0.0
        %883 = vmatpush.msra.mxu0 0.0
        %884 = vmatpush.msra.mxu0 0.0
        %885 = vmatpush.msra.mxu0 0.0
        %886 = vmatpush.msra.mxu0 0.0
        %887 = vmatpush.msra.mxu0 0.0
        %888 = vmatpush.msra.mxu0 0.0
        %889 = vmatpush.msra.mxu0 0.0
        %890 = vmatpush.msra.mxu0 0.0
        %891 = vmatpush.msra.mxu0 0.0
        %892 = vmatpush.msra.mxu0 %v868
        %893 = vmatpush.msra.mxu0 %v867
        %894 = vmatpush.msra.mxu0 %v866
        %895 = vmatpush.msra.mxu0 %v865
        %896 = vmatmul.f32.gmra.mxu0 %v875
        %v897 = vpop.f32.mrf.mxu0
        %v898 = vadd.f32 %v871, %v897
        %899 = vmatmul.f32.gmra.mxu0 %v878
        %v900 = vpop.f32.mrf.mxu0
        %v901 = vadd.f32 %v871, %v900
        %902 = vdwg.mxu0
        %904 = vrot.lane.b32.xlu0 %v898, 96
        %v905 = vpop.permute.xlu0 %904
        %vm906 = vcmask 64512
        %v907 = vsel %vm906, %v898, 0
        %v909 = vsel %vm906, %v905, 0
        %911 = vmatpush.xpose.msra.mxu0 0.0
        %912 = vmatpush.xpose.msra.mxu0 0.0
        %913 = vmatpush.xpose.msra.mxu0 0.0
        %914 = vmatpush.xpose.msra.mxu0 0.0
        %915 = vmatpush.xpose.msra.mxu0 0.0
        %916 = vmatpush.xpose.msra.mxu0 0.0
        %917 = vmatpush.xpose.msra.mxu0 0.0
        %918 = vmatpush.xpose.msra.mxu0 0.0
        %919 = vmatpush.xpose.msra.mxu0 0.0
        %920 = vmatpush.xpose.msra.mxu0 0.0
        %921 = vmatpush.xpose.msra.mxu0 0.0
        %922 = vmatpush.xpose.msra.mxu0 0.0
        %923 = vmatpush.xpose.msra.mxu0 0.0
        %924 = vmatpush.xpose.msra.mxu0 0.0
        %925 = vmatpush.xpose.msra.mxu0 0.0
        %926 = vmatpush.xpose.msra.mxu0 %v909
        %927 = vmatmul.f32.gmra.mxu0 %v907
        %v928 = vpop.f32.mrf.mxu0
        %v929 = vadd.f32 0.0, %v928
        %930 = vdwg.mxu0
        %932 = vrot.lane.b32.xlu0 %v901, 96
        %v933 = vpop.permute.xlu0 %932
        %v934 = vsel %vm906, %v901, 0
        %v936 = vsel %vm906, %v933, 0
        %938 = vmatpush.xpose.msra.mxu0 0.0
        %939 = vmatpush.xpose.msra.mxu0 0.0
        %940 = vmatpush.xpose.msra.mxu0 0.0
        %941 = vmatpush.xpose.msra.mxu0 0.0
        %942 = vmatpush.xpose.msra.mxu0 0.0
        %943 = vmatpush.xpose.msra.mxu0 0.0
        %944 = vmatpush.xpose.msra.mxu0 0.0
        %945 = vmatpush.xpose.msra.mxu0 0.0
        %946 = vmatpush.xpose.msra.mxu0 0.0
        %947 = vmatpush.xpose.msra.mxu0 0.0
        %948 = vmatpush.xpose.msra.mxu0 0.0
        %949 = vmatpush.xpose.msra.mxu0 0.0
        %950 = vmatpush.xpose.msra.mxu0 0.0
        %951 = vmatpush.xpose.msra.mxu0 0.0
        %952 = vmatpush.xpose.msra.mxu0 0.0
        %953 = vmatpush.xpose.msra.mxu0 %v936
        %954 = vmatmul.f32.gmra.mxu0 %v934
        %v955 = vpop.f32.mrf.mxu0
        %v956 = vadd.f32 0.0, %v955
        %957 = vdwg.mxu0
        %v958 = vmul.f32 %v929, 0.35355338
        %v959 = vmul.f32 %v956, 0.35355338
        %v962 = vperm.slane %v863, 0
        %v963 = vperm.slane %v864, 0
        %v966 = vadd.f32 %v958, %v962
        %v967 = vadd.f32 %v959, %v963
        %v968 = vsel %vm906, %v966, -inf
        %969 = vmax.xlane.f32.xlu0 %v968
        %v970 = vpop.xlane.xlu0 %969
        %v971 = vsel %vm906, %v967, -inf
        %972 = vmax.xlane.f32.xlu0 %v971
        %v973 = vpop.xlane.xlu0 %972
        %v974 = vsub.f32 %v966, %v970
        %v975 = vsub.f32 %v967, %v973
        %v976 = vmul.f32 %v974, 1.442695
        %v977 = vpow.pop %v976
        %v978 = vmul.f32 %v975, 1.442695
        %v979 = vpow.pop %v978
        %v980 = vsel %vm906, %v977, 0.0
        %981 = vadd.xlane.f32.xlu0 %v980
        %v982 = vpop.xlane.xlu0 %981
        %v983 = vsel %vm906, %v979, 0.0
        %984 = vadd.xlane.f32.xlu0 %v983
        %v985 = vpop.xlane.xlu0 %984
        %v986 = vrcp.pop %v982
        %v987 = vrcp.pop %v985
        %v988 = vmul.f32 %v977, %v986
        %v989 = vmul.f32 %v979, %v987
        %990 = vrot.lane.b32.xlu0 %v898, 64
        %v991 = vpop.permute.xlu0 %990
        %v994 = vsel %vm906, %v988, 0
        %996 = vmatpush.msra.mxu0 0.0
        %997 = vmatpush.msra.mxu0 0.0
        %998 = vmatpush.msra.mxu0 0.0
        %999 = vmatpush.msra.mxu0 0.0
        %1000 = vmatpush.msra.mxu0 0.0
        %1001 = vmatpush.msra.mxu0 0.0
        %1002 = vmatpush.msra.mxu0 0.0
        %1003 = vmatpush.msra.mxu0 0.0
        %1004 = vmatpush.msra.mxu0 0.0
        %1005 = vmatpush.msra.mxu0 0.0
        %1006 = vmatpush.msra.mxu0 0.0
        %1007 = vmatpush.msra.mxu0 0.0
        %1008 = vmatpush.msra.mxu0 0.0
        %1009 = vmatpush.msra.mxu0 0.0
        %1010 = vmatpush.msra.mxu0 0.0
        %1011 = vmatpush.msra.mxu0 %v991
        %1012 = vmatmul.f32.gmra.mxu0 %v994
        %v1013 = vpop.f32.mrf.mxu0
        %v1014 = vadd.f32 0.0, %v1013
        %1015 = vdwg.mxu0
        %1016 = vrot.lane.b32.xlu0 %v901, 64
        %v1017 = vpop.permute.xlu0 %1016
        %v1020 = vsel %vm906, %v989, 0
        %1022 = vmatpush.msra.mxu0 0.0
        %1023 = vmatpush.msra.mxu0 0.0
        %1024 = vmatpush.msra.mxu0 0.0
        %1025 = vmatpush.msra.mxu0 0.0
        %1026 = vmatpush.msra.mxu0 0.0
        %1027 = vmatpush.msra.mxu0 0.0
        %1028 = vmatpush.msra.mxu0 0.0
        %1029 = vmatpush.msra.mxu0 0.0
        %1030 = vmatpush.msra.mxu0 0.0
        %1031 = vmatpush.msra.mxu0 0.0
        %1032 = vmatpush.msra.mxu0 0.0
        %1033 = vmatpush.msra.mxu0 0.0
        %1034 = vmatpush.msra.mxu0 0.0
        %1035 = vmatpush.msra.mxu0 0.0
        %1036 = vmatpush.msra.mxu0 0.0
        %1037 = vmatpush.msra.mxu0 %v1017
        %1038 = vmatmul.f32.gmra.mxu0 %v1020
        %v1039 = vpop.f32.mrf.mxu0
        %v1040 = vadd.f32 0.0, %v1039
        %1041 = vdwg.mxu0
        %1042 = vrot.lane.b32.xlu0 %v898, 120
        %v1043 = vpop.permute.xlu0 %1042
        %1044 = vrot.lane.b32.xlu0 %v898, 88
        %v1045 = vpop.permute.xlu0 %1044
        %v1046 = vsel %vm906, %v1043, 0
        %v1048 = vsel %vm906, %v1045, 0
        %1050 = vmatpush.xpose.msra.mxu0 0.0
        %1051 = vmatpush.xpose.msra.mxu0 0.0
        %1052 = vmatpush.xpose.msra.mxu0 0.0
        %1053 = vmatpush.xpose.msra.mxu0 0.0
        %1054 = vmatpush.xpose.msra.mxu0 0.0
        %1055 = vmatpush.xpose.msra.mxu0 0.0
        %1056 = vmatpush.xpose.msra.mxu0 0.0
        %1057 = vmatpush.xpose.msra.mxu0 0.0
        %1058 = vmatpush.xpose.msra.mxu0 0.0
        %1059 = vmatpush.xpose.msra.mxu0 0.0
        %1060 = vmatpush.xpose.msra.mxu0 0.0
        %1061 = vmatpush.xpose.msra.mxu0 0.0
        %1062 = vmatpush.xpose.msra.mxu0 0.0
        %1063 = vmatpush.xpose.msra.mxu0 0.0
        %1064 = vmatpush.xpose.msra.mxu0 0.0
        %1065 = vmatpush.xpose.msra.mxu0 %v1048
        %1066 = vmatmul.f32.gmra.mxu0 %v1046
        %v1067 = vpop.f32.mrf.mxu0
        %v1068 = vadd.f32 0.0, %v1067
        %1069 = vdwg.mxu0
        %1070 = vrot.lane.b32.xlu0 %v901, 120
        %v1071 = vpop.permute.xlu0 %1070
        %1072 = vrot.lane.b32.xlu0 %v901, 88
        %v1073 = vpop.permute.xlu0 %1072
        %v1074 = vsel %vm906, %v1071, 0
        %v1076 = vsel %vm906, %v1073, 0
        %1078 = vmatpush.xpose.msra.mxu0 0.0
        %1079 = vmatpush.xpose.msra.mxu0 0.0
        %1080 = vmatpush.xpose.msra.mxu0 0.0
        %1081 = vmatpush.xpose.msra.mxu0 0.0
        %1082 = vmatpush.xpose.msra.mxu0 0.0
        %1083 = vmatpush.xpose.msra.mxu0 0.0
        %1084 = vmatpush.xpose.msra.mxu0 0.0
        %1085 = vmatpush.xpose.msra.mxu0 0.0
        %1086 = vmatpush.xpose.msra.mxu0 0.0
        %1087 = vmatpush.xpose.msra.mxu0 0.0
        %1088 = vmatpush.xpose.msra.mxu0 0.0
        %1089 = vmatpush.xpose.msra.mxu0 0.0
        %1090 = vmatpush.xpose.msra.mxu0 0.0
        %1091 = vmatpush.xpose.msra.mxu0 0.0
        %1092 = vmatpush.xpose.msra.mxu0 0.0
        %1093 = vmatpush.xpose.msra.mxu0 %v1076
        %1094 = vmatmul.f32.gmra.mxu0 %v1074
        %v1095 = vpop.f32.mrf.mxu0
        %v1096 = vadd.f32 0.0, %v1095
        %1097 = vdwg.mxu0
        %v1098 = vmul.f32 %v1068, 0.35355338
        %v1099 = vmul.f32 %v1096, 0.35355338
        %v1100 = vadd.f32 %v1098, %v962
        %v1101 = vadd.f32 %v1099, %v963
        %v1102 = vsel %vm906, %v1100, -inf
        %1103 = vmax.xlane.f32.xlu0 %v1102
        %v1104 = vpop.xlane.xlu0 %1103
        %v1105 = vsel %vm906, %v1101, -inf
        %1106 = vmax.xlane.f32.xlu0 %v1105
        %v1107 = vpop.xlane.xlu0 %1106
        %v1108 = vsub.f32 %v1100, %v1104
        %v1109 = vsub.f32 %v1101, %v1107
        %v1110 = vmul.f32 %v1108, 1.442695
        %v1111 = vpow.pop %v1110
        %v1112 = vmul.f32 %v1109, 1.442695
        %v1113 = vpow.pop %v1112
        %v1114 = vsel %vm906, %v1111, 0.0
        %1115 = vadd.xlane.f32.xlu0 %v1114
        %v1116 = vpop.xlane.xlu0 %1115
        %v1117 = vsel %vm906, %v1113, 0.0
        %1118 = vadd.xlane.f32.xlu0 %v1117
        %v1119 = vpop.xlane.xlu0 %1118
        %v1120 = vrcp.pop %v1116
        %v1121 = vrcp.pop %v1119
        %v1122 = vmul.f32 %v1111, %v1120
        %v1123 = vmul.f32 %v1113, %v1121
        %1124 = vrot.lane.b32.xlu0 %v898, 56
        %v1125 = vpop.permute.xlu0 %1124
        %v1128 = vsel %vm906, %v1122, 0
        %1130 = vmatpush.msra.mxu0 0.0
        %1131 = vmatpush.msra.mxu0 0.0
        %1132 = vmatpush.msra.mxu0 0.0
        %1133 = vmatpush.msra.mxu0 0.0
        %1134 = vmatpush.msra.mxu0 0.0
        %1135 = vmatpush.msra.mxu0 0.0
        %1136 = vmatpush.msra.mxu0 0.0
        %1137 = vmatpush.msra.mxu0 0.0
        %1138 = vmatpush.msra.mxu0 0.0
        %1139 = vmatpush.msra.mxu0 0.0
        %1140 = vmatpush.msra.mxu0 0.0
        %1141 = vmatpush.msra.mxu0 0.0
        %1142 = vmatpush.msra.mxu0 0.0
        %1143 = vmatpush.msra.mxu0 0.0
        %1144 = vmatpush.msra.mxu0 0.0
        %1145 = vmatpush.msra.mxu0 %v1125
        %1146 = vmatmul.f32.gmra.mxu0 %v1128
        %v1147 = vpop.f32.mrf.mxu0
        %v1148 = vadd.f32 0.0, %v1147
        %1149 = vdwg.mxu0
        %1150 = vrot.lane.b32.xlu0 %v901, 56
        %v1151 = vpop.permute.xlu0 %1150
        %v1154 = vsel %vm906, %v1123, 0
        %1156 = vmatpush.msra.mxu0 0.0
        %1157 = vmatpush.msra.mxu0 0.0
        %1158 = vmatpush.msra.mxu0 0.0
        %1159 = vmatpush.msra.mxu0 0.0
        %1160 = vmatpush.msra.mxu0 0.0
        %1161 = vmatpush.msra.mxu0 0.0
        %1162 = vmatpush.msra.mxu0 0.0
        %1163 = vmatpush.msra.mxu0 0.0
        %1164 = vmatpush.msra.mxu0 0.0
        %1165 = vmatpush.msra.mxu0 0.0
        %1166 = vmatpush.msra.mxu0 0.0
        %1167 = vmatpush.msra.mxu0 0.0
        %1168 = vmatpush.msra.mxu0 0.0
        %1169 = vmatpush.msra.mxu0 0.0
        %1170 = vmatpush.msra.mxu0 0.0
        %1171 = vmatpush.msra.mxu0 %v1151
        %1172 = vmatmul.f32.gmra.mxu0 %v1154
        %v1173 = vpop.f32.mrf.mxu0
        %v1174 = vadd.f32 0.0, %v1173
        %1175 = vdwg.mxu0
        %1176 = vrot.lane.b32.xlu0 %v898, 112
        %v1177 = vpop.permute.xlu0 %1176
        %1178 = vrot.lane.b32.xlu0 %v898, 80
        %v1179 = vpop.permute.xlu0 %1178
        %v1180 = vsel %vm906, %v1177, 0
        %v1182 = vsel %vm906, %v1179, 0
        %1184 = vmatpush.xpose.msra.mxu0 0.0
        %1185 = vmatpush.xpose.msra.mxu0 0.0
        %1186 = vmatpush.xpose.msra.mxu0 0.0
        %1187 = vmatpush.xpose.msra.mxu0 0.0
        %1188 = vmatpush.xpose.msra.mxu0 0.0
        %1189 = vmatpush.xpose.msra.mxu0 0.0
        %1190 = vmatpush.xpose.msra.mxu0 0.0
        %1191 = vmatpush.xpose.msra.mxu0 0.0
        %1192 = vmatpush.xpose.msra.mxu0 0.0
        %1193 = vmatpush.xpose.msra.mxu0 0.0
        %1194 = vmatpush.xpose.msra.mxu0 0.0
        %1195 = vmatpush.xpose.msra.mxu0 0.0
        %1196 = vmatpush.xpose.msra.mxu0 0.0
        %1197 = vmatpush.xpose.msra.mxu0 0.0
        %1198 = vmatpush.xpose.msra.mxu0 0.0
        %1199 = vmatpush.xpose.msra.mxu0 %v1182
        %1200 = vmatmul.f32.gmra.mxu0 %v1180
        %v1201 = vpop.f32.mrf.mxu0
        %v1202 = vadd.f32 0.0, %v1201
        %1203 = vdwg.mxu0
        %1204 = vrot.lane.b32.xlu0 %v901, 112
        %v1205 = vpop.permute.xlu0 %1204
        %1206 = vrot.lane.b32.xlu0 %v901, 80
        %v1207 = vpop.permute.xlu0 %1206
        %v1208 = vsel %vm906, %v1205, 0
        %v1210 = vsel %vm906, %v1207, 0
        %1212 = vmatpush.xpose.msra.mxu0 0.0
        %1213 = vmatpush.xpose.msra.mxu0 0.0
        %1214 = vmatpush.xpose.msra.mxu0 0.0
        %1215 = vmatpush.xpose.msra.mxu0 0.0
        %1216 = vmatpush.xpose.msra.mxu0 0.0
        %1217 = vmatpush.xpose.msra.mxu0 0.0
        %1218 = vmatpush.xpose.msra.mxu0 0.0
        %1219 = vmatpush.xpose.msra.mxu0 0.0
        %1220 = vmatpush.xpose.msra.mxu0 0.0
        %1221 = vmatpush.xpose.msra.mxu0 0.0
        %1222 = vmatpush.xpose.msra.mxu0 0.0
        %1223 = vmatpush.xpose.msra.mxu0 0.0
        %1224 = vmatpush.xpose.msra.mxu0 0.0
        %1225 = vmatpush.xpose.msra.mxu0 0.0
        %1226 = vmatpush.xpose.msra.mxu0 0.0
        %1227 = vmatpush.xpose.msra.mxu0 %v1210
        %1228 = vmatmul.f32.gmra.mxu0 %v1208
        %v1229 = vpop.f32.mrf.mxu0
        %v1230 = vadd.f32 0.0, %v1229
        %1231 = vdwg.mxu0
        %v1232 = vmul.f32 %v1202, 0.35355338
        %v1233 = vmul.f32 %v1230, 0.35355338
        %v1234 = vadd.f32 %v1232, %v962
        %v1235 = vadd.f32 %v1233, %v963
        %v1236 = vsel %vm906, %v1234, -inf
        %1237 = vmax.xlane.f32.xlu0 %v1236
        %v1238 = vpop.xlane.xlu0 %1237
        %v1239 = vsel %vm906, %v1235, -inf
        %1240 = vmax.xlane.f32.xlu0 %v1239
        %v1241 = vpop.xlane.xlu0 %1240
        %v1242 = vsub.f32 %v1234, %v1238
        %v1243 = vsub.f32 %v1235, %v1241
        %v1244 = vmul.f32 %v1242, 1.442695
        %v1245 = vpow.pop %v1244
        %v1246 = vmul.f32 %v1243, 1.442695
        %v1247 = vpow.pop %v1246
        %v1248 = vsel %vm906, %v1245, 0.0
        %1249 = vadd.xlane.f32.xlu0 %v1248
        %v1250 = vpop.xlane.xlu0 %1249
        %v1251 = vsel %vm906, %v1247, 0.0
        %1252 = vadd.xlane.f32.xlu0 %v1251
        %v1253 = vpop.xlane.xlu0 %1252
        %v1254 = vrcp.pop %v1250
        %v1255 = vrcp.pop %v1253
        %v1256 = vmul.f32 %v1245, %v1254
        %v1257 = vmul.f32 %v1247, %v1255
        %1258 = vrot.lane.b32.xlu0 %v898, 48
        %v1259 = vpop.permute.xlu0 %1258
        %v1262 = vsel %vm906, %v1256, 0
        %1264 = vmatpush.msra.mxu0 0.0
        %1265 = vmatpush.msra.mxu0 0.0
        %1266 = vmatpush.msra.mxu0 0.0
        %1267 = vmatpush.msra.mxu0 0.0
        %1268 = vmatpush.msra.mxu0 0.0
        %1269 = vmatpush.msra.mxu0 0.0
        %1270 = vmatpush.msra.mxu0 0.0
        %1271 = vmatpush.msra.mxu0 0.0
        %1272 = vmatpush.msra.mxu0 0.0
        %1273 = vmatpush.msra.mxu0 0.0
        %1274 = vmatpush.msra.mxu0 0.0
        %1275 = vmatpush.msra.mxu0 0.0
        %1276 = vmatpush.msra.mxu0 0.0
        %1277 = vmatpush.msra.mxu0 0.0
        %1278 = vmatpush.msra.mxu0 0.0
        %1279 = vmatpush.msra.mxu0 %v1259
        %1280 = vmatmul.f32.gmra.mxu0 %v1262
        %v1281 = vpop.f32.mrf.mxu0
        %v1282 = vadd.f32 0.0, %v1281
        %1283 = vdwg.mxu0
        %1284 = vrot.lane.b32.xlu0 %v901, 48
        %v1285 = vpop.permute.xlu0 %1284
        %v1288 = vsel %vm906, %v1257, 0
        %1290 = vmatpush.msra.mxu0 0.0
        %1291 = vmatpush.msra.mxu0 0.0
        %1292 = vmatpush.msra.mxu0 0.0
        %1293 = vmatpush.msra.mxu0 0.0
        %1294 = vmatpush.msra.mxu0 0.0
        %1295 = vmatpush.msra.mxu0 0.0
        %1296 = vmatpush.msra.mxu0 0.0
        %1297 = vmatpush.msra.mxu0 0.0
        %1298 = vmatpush.msra.mxu0 0.0
        %1299 = vmatpush.msra.mxu0 0.0
        %1300 = vmatpush.msra.mxu0 0.0
        %1301 = vmatpush.msra.mxu0 0.0
        %1302 = vmatpush.msra.mxu0 0.0
        %1303 = vmatpush.msra.mxu0 0.0
        %1304 = vmatpush.msra.mxu0 0.0
        %1305 = vmatpush.msra.mxu0 %v1285
        %1306 = vmatmul.f32.gmra.mxu0 %v1288
        %v1307 = vpop.f32.mrf.mxu0
        %v1308 = vadd.f32 0.0, %v1307
        %1309 = vdwg.mxu0
        %1310 = vrot.lane.b32.xlu0 %v898, 104
        %v1311 = vpop.permute.xlu0 %1310
        %1312 = vrot.lane.b32.xlu0 %v898, 72
        %v1313 = vpop.permute.xlu0 %1312
        %v1314 = vsel %vm906, %v1311, 0
        %v1316 = vsel %vm906, %v1313, 0
        %1318 = vmatpush.xpose.msra.mxu0 0.0
        %1319 = vmatpush.xpose.msra.mxu0 0.0
        %1320 = vmatpush.xpose.msra.mxu0 0.0
        %1321 = vmatpush.xpose.msra.mxu0 0.0
        %1322 = vmatpush.xpose.msra.mxu0 0.0
        %1323 = vmatpush.xpose.msra.mxu0 0.0
        %1324 = vmatpush.xpose.msra.mxu0 0.0
        %1325 = vmatpush.xpose.msra.mxu0 0.0
        %1326 = vmatpush.xpose.msra.mxu0 0.0
        %1327 = vmatpush.xpose.msra.mxu0 0.0
        %1328 = vmatpush.xpose.msra.mxu0 0.0
        %1329 = vmatpush.xpose.msra.mxu0 0.0
        %1330 = vmatpush.xpose.msra.mxu0 0.0
        %1331 = vmatpush.xpose.msra.mxu0 0.0
        %1332 = vmatpush.xpose.msra.mxu0 0.0
        %1333 = vmatpush.xpose.msra.mxu0 %v1316
        %1334 = vmatmul.f32.gmra.mxu0 %v1314
        %v1335 = vpop.f32.mrf.mxu0
        %v1336 = vadd.f32 0.0, %v1335
        %1337 = vdwg.mxu0
        %1338 = vrot.lane.b32.xlu0 %v901, 104
        %v1339 = vpop.permute.xlu0 %1338
        %1340 = vrot.lane.b32.xlu0 %v901, 72
        %v1341 = vpop.permute.xlu0 %1340
        %v1342 = vsel %vm906, %v1339, 0
        %v1344 = vsel %vm906, %v1341, 0
        %1346 = vmatpush.xpose.msra.mxu0 0.0
        %1347 = vmatpush.xpose.msra.mxu0 0.0
        %1348 = vmatpush.xpose.msra.mxu0 0.0
        %1349 = vmatpush.xpose.msra.mxu0 0.0
        %1350 = vmatpush.xpose.msra.mxu0 0.0
        %1351 = vmatpush.xpose.msra.mxu0 0.0
        %1352 = vmatpush.xpose.msra.mxu0 0.0
        %1353 = vmatpush.xpose.msra.mxu0 0.0
        %1354 = vmatpush.xpose.msra.mxu0 0.0
        %1355 = vmatpush.xpose.msra.mxu0 0.0
        %1356 = vmatpush.xpose.msra.mxu0 0.0
        %1357 = vmatpush.xpose.msra.mxu0 0.0
        %1358 = vmatpush.xpose.msra.mxu0 0.0
        %1359 = vmatpush.xpose.msra.mxu0 0.0
        %1360 = vmatpush.xpose.msra.mxu0 0.0
        %1361 = vmatpush.xpose.msra.mxu0 %v1344
        %1362 = vmatmul.f32.gmra.mxu0 %v1342
        %v1363 = vpop.f32.mrf.mxu0
        %v1364 = vadd.f32 0.0, %v1363
        %1365 = vdwg.mxu0
        %v1366 = vmul.f32 %v1336, 0.35355338
        %v1367 = vmul.f32 %v1364, 0.35355338
        %v1368 = vadd.f32 %v1366, %v962
        %v1369 = vadd.f32 %v1367, %v963
        %v1370 = vsel %vm906, %v1368, -inf
        %1371 = vmax.xlane.f32.xlu0 %v1370
        %v1372 = vpop.xlane.xlu0 %1371
        %v1373 = vsel %vm906, %v1369, -inf
        %1374 = vmax.xlane.f32.xlu0 %v1373
        %v1375 = vpop.xlane.xlu0 %1374
        %v1376 = vsub.f32 %v1368, %v1372
        %v1377 = vsub.f32 %v1369, %v1375
        %v1378 = vmul.f32 %v1376, 1.442695
        %v1379 = vpow.pop %v1378
        %v1380 = vmul.f32 %v1377, 1.442695
        %v1381 = vpow.pop %v1380
        %v1382 = vsel %vm906, %v1379, 0.0
        %1383 = vadd.xlane.f32.xlu0 %v1382
        %v1384 = vpop.xlane.xlu0 %1383
        %v1385 = vsel %vm906, %v1381, 0.0
        %1386 = vadd.xlane.f32.xlu0 %v1385
        %v1387 = vpop.xlane.xlu0 %1386
        %v1388 = vrcp.pop %v1384
        %v1389 = vrcp.pop %v1387
        %v1390 = vmul.f32 %v1379, %v1388
        %v1391 = vmul.f32 %v1381, %v1389
        %1392 = vrot.lane.b32.xlu0 %v898, 40
        %v1393 = vpop.permute.xlu0 %1392
        %v1396 = vsel %vm906, %v1390, 0
        %1398 = vmatpush.msra.mxu0 0.0
        %1399 = vmatpush.msra.mxu0 0.0
        %1400 = vmatpush.msra.mxu0 0.0
        %1401 = vmatpush.msra.mxu0 0.0
        %1402 = vmatpush.msra.mxu0 0.0
        %1403 = vmatpush.msra.mxu0 0.0
        %1404 = vmatpush.msra.mxu0 0.0
        %1405 = vmatpush.msra.mxu0 0.0
        %1406 = vmatpush.msra.mxu0 0.0
        %1407 = vmatpush.msra.mxu0 0.0
        %1408 = vmatpush.msra.mxu0 0.0
        %1409 = vmatpush.msra.mxu0 0.0
        %1410 = vmatpush.msra.mxu0 0.0
        %1411 = vmatpush.msra.mxu0 0.0
        %1412 = vmatpush.msra.mxu0 0.0
        %1413 = vmatpush.msra.mxu0 %v1393
        %1414 = vmatmul.f32.gmra.mxu0 %v1396
        %v1415 = vpop.f32.mrf.mxu0
        %v1416 = vadd.f32 0.0, %v1415
        %1417 = vdwg.mxu0
        %1418 = vrot.lane.b32.xlu0 %v901, 40
        %v1419 = vpop.permute.xlu0 %1418
        %v1422 = vsel %vm906, %v1391, 0
        %1424 = vmatpush.msra.mxu0 0.0
        %1425 = vmatpush.msra.mxu0 0.0
        %1426 = vmatpush.msra.mxu0 0.0
        %1427 = vmatpush.msra.mxu0 0.0
        %1428 = vmatpush.msra.mxu0 0.0
        %1429 = vmatpush.msra.mxu0 0.0
        %1430 = vmatpush.msra.mxu0 0.0
        %1431 = vmatpush.msra.mxu0 0.0
        %1432 = vmatpush.msra.mxu0 0.0
        %1433 = vmatpush.msra.mxu0 0.0
        %1434 = vmatpush.msra.mxu0 0.0
        %1435 = vmatpush.msra.mxu0 0.0
        %1436 = vmatpush.msra.mxu0 0.0
        %1437 = vmatpush.msra.mxu0 0.0
        %1438 = vmatpush.msra.mxu0 0.0
        %1439 = vmatpush.msra.mxu0 %v1419
        %1440 = vmatmul.f32.gmra.mxu0 %v1422
        %v1441 = vpop.f32.mrf.mxu0
        %v1442 = vadd.f32 0.0, %v1441
        %1443 = vdwg.mxu0
        %1446 = vrot.lane.b32.xlu0 %v1148, 8
        %v1447 = vpop.permute.xlu0 %1446
        %1448 = vrot.lane.b32.xlu0 %v1174, 8
        %v1449 = vpop.permute.xlu0 %1448
        %1454 = vrot.lane.b32.xlu0 %v1282, 16
        %v1455 = vpop.permute.xlu0 %1454
        %1456 = vrot.lane.b32.xlu0 %v1308, 16
        %v1457 = vpop.permute.xlu0 %1456
        %1462 = vrot.lane.b32.xlu0 %v1416, 24
        %v1463 = vpop.permute.xlu0 %1462
        %1464 = vrot.lane.b32.xlu0 %v1442, 24
        %v1465 = vpop.permute.xlu0 %1464
        %v1468 = vsel %vm906, %v1014, %v1447
        %v1469 = vsel %vm906, %v1040, %v1449
        %vm1470 = vcmask 130048
        %v1471 = vsel %vm1470, %v1468, %v1455
        %v1472 = vsel %vm1470, %v1469, %v1457
        %vm1473 = vcmask 195584
        %v1474 = vsel %vm1473, %v1471, %v1463
        %v1475 = vsel %vm1473, %v1472, %v1465
        %v1476 = vld [vmem:[%s823] sm:$0xff]
        %v1477 = vld [vmem:[%s823 + $0x8] sm:$0xff]
        %v1478 = vld [vmem:[%s823 + $0x10] sm:$0xff]
        %v1479 = vld [vmem:[%s823 + $0x18] sm:$0xff]
        %v1480 = vld [vmem:[%s826] sm:$0x1]
        %v1482 = vperm.slane %v1480, 0
        %v1485 = vsel %vm873, %v1474, 0
        %v1488 = vsel %vm873, %v1475, 0
        %1490 = vmatpush.msra.mxu0 0.0
        %1491 = vmatpush.msra.mxu0 0.0
        %1492 = vmatpush.msra.mxu0 0.0
        %1493 = vmatpush.msra.mxu0 0.0
        %1494 = vmatpush.msra.mxu0 0.0
        %1495 = vmatpush.msra.mxu0 0.0
        %1496 = vmatpush.msra.mxu0 0.0
        %1497 = vmatpush.msra.mxu0 0.0
        %1498 = vmatpush.msra.mxu0 0.0
        %1499 = vmatpush.msra.mxu0 0.0
        %1500 = vmatpush.msra.mxu0 0.0
        %1501 = vmatpush.msra.mxu0 0.0
        %1502 = vmatpush.msra.mxu0 %v1479
        %1503 = vmatpush.msra.mxu0 %v1478
        %1504 = vmatpush.msra.mxu0 %v1477
        %1505 = vmatpush.msra.mxu0 %v1476
        %1506 = vmatmul.f32.gmra.mxu0 %v1485
        %v1507 = vpop.f32.mrf.mxu0
        %v1508 = vadd.f32 %v1482, %v1507
        %1509 = vmatmul.f32.gmra.mxu0 %v1488
        %v1510 = vpop.f32.mrf.mxu0
        %v1511 = vadd.f32 %v1482, %v1510
        %1512 = vdwg.mxu0
        %v1513 = vadd.f32 %v1508, %v859
        %v1514 = vadd.f32 %v1511, %v860
        %v1515 = vsel %vm873, %v1513, 0.0
        %1516 = vadd.xlane.f32.xlu0 %v1515
        %v1517 = vpop.xlane.xlu0 %1516
        %v1518 = vsel %vm873, %v1514, 0.0
        %1519 = vadd.xlane.f32.xlu0 %v1518
        %v1520 = vpop.xlane.xlu0 %1519
        %v1521 = vrcp.pop 32.0
        %v1522 = vmul.f32 32.0, %v1521
        %v1523 = vsub.f32 1.0, %v1522
        %v1524 = vmul.f32 %v1521, %v1523
        %v1525 = vadd.f32 %v1521, %v1524
        %vm1526 = vweird.f32 %v1521
        %v1527 = vsel %vm1526, %v1521, %v1525
        %v1528 = vmul.f32 %v1517, %v1527
        %v1529 = vmul.f32 %v1520, %v1527
        %v1530 = vsub.f32 %v1513, %v1528
        %v1531 = vsub.f32 %v1514, %v1529
        %v1532 = vmul.f32 %v1530, %v1530
        %v1533 = vmul.f32 %v1531, %v1531
        %v1534 = vsel %vm873, %v1532, 0.0
        %1535 = vadd.xlane.f32.xlu0 %v1534
        %v1536 = vpop.xlane.xlu0 %1535
        %v1537 = vsel %vm873, %v1533, 0.0
        %1538 = vadd.xlane.f32.xlu0 %v1537
        %v1539 = vpop.xlane.xlu0 %1538
        %v1540 = vmul.f32 %v1536, %v1527
        %v1541 = vmul.f32 %v1539, %v1527
        %v1542 = vadd.f32 %v1540, 1e-05
        %v1543 = vadd.f32 %v1541, 1e-05
        %v1544 = vrsqrt.pop %v1542
        %v1545 = vmul.f32 %v1544, %v1542
        %v1546 = vmul.f32 %v1545, %v1544
        %v1547 = vmul.f32 0.5, %v1546
        %v1548 = vsub.f32 1.5, %v1547
        %v1549 = vmul.f32 %v1544, %v1548
        %vm1550 = vweird.f32 %v1542
        %vm1551 = vweird.f32 %v1544
        %vm1552 = vmor %vm1550, %vm1551
        %v1553 = vsel %vm1552, %v1544, %v1549
        %v1554 = vrsqrt.pop %v1543
        %v1555 = vmul.f32 %v1554, %v1543
        %v1556 = vmul.f32 %v1555, %v1554
        %v1557 = vmul.f32 0.5, %v1556
        %v1558 = vsub.f32 1.5, %v1557
        %v1559 = vmul.f32 %v1554, %v1558
        %vm1560 = vweird.f32 %v1543
        %vm1561 = vweird.f32 %v1554
        %vm1562 = vmor %vm1560, %vm1561
        %v1563 = vsel %vm1562, %v1554, %v1559
        %v1564 = vmul.f32 %v1530, %v1553
        %v1565 = vmul.f32 %v1531, %v1563
        %v1566 = vld [vmem:[%s829] sm:$0x1]
        %v1568 = vperm.slane %v1566, 0
        %v1570 = vmul.f32 %v1564, %v1568
        %v1571 = vmul.f32 %v1565, %v1568
        %v1572 = vld [vmem:[%s686] sm:$0x1]
        %v1574 = vperm.slane %v1572, 0
        %v1576 = vadd.f32 %v1570, %v1574
        %v1577 = vadd.f32 %v1571, %v1574
        %1579 = vset.pattern.permute.xlu0 0
        %1580 = vperm.xlu0 %1579, %v861
        %v1581 = vpop.permute.xlu0 %1580
        %1584 = vset.pattern.permute.xlu0 0
        %1585 = vperm.xlu0 %1584, %v862
        %v1586 = vpop.permute.xlu0 %1585
        %v1588 = vmul.f32 %v1576, %v1581
        %v1589 = vmul.f32 %v1577, %v1586
        %v1590 = vld [vmem:[%s834] sm:$0xff]
        %v1591 = vld [vmem:[%s834 + $0x8] sm:$0xff]
        %v1592 = vld [vmem:[%s834 + $0x10] sm:$0xff]
        %v1593 = vld [vmem:[%s834 + $0x18] sm:$0xff]
        %v1594 = vld [vmem:[%s837] sm:$0x1]
        %v1596 = vperm.slane %v1594, 0
        %v1599 = vsel %vm873, %v1588, 0
        %v1602 = vsel %vm873, %v1589, 0
        %1604 = vmatpush.msra.mxu0 0.0
        %1605 = vmatpush.msra.mxu0 0.0
        %1606 = vmatpush.msra.mxu0 0.0
        %1607 = vmatpush.msra.mxu0 0.0
        %1608 = vmatpush.msra.mxu0 0.0
        %1609 = vmatpush.msra.mxu0 0.0
        %1610 = vmatpush.msra.mxu0 0.0
        %1611 = vmatpush.msra.mxu0 0.0
        %1612 = vmatpush.msra.mxu0 0.0
        %1613 = vmatpush.msra.mxu0 0.0
        %1614 = vmatpush.msra.mxu0 0.0
        %1615 = vmatpush.msra.mxu0 0.0
        %1616 = vmatpush.msra.mxu0 %v1593
        %1617 = vmatpush.msra.mxu0 %v1592
        %1618 = vmatpush.msra.mxu0 %v1591
        %1619 = vmatpush.msra.mxu0 %v1590
        %1620 = vmatmul.f32.gmra.mxu0 %v1599
        %v1621 = vpop.f32.mrf.mxu0
        %v1622 = vadd.f32 %v1596, %v1621
        %1623 = vmatmul.f32.gmra.mxu0 %v1602
        %v1624 = vpop.f32.mrf.mxu0
        %v1625 = vadd.f32 %v1596, %v1624
        %1626 = vdwg.mxu0
        %v1627 = vmax.f32 %v1622, 0.0
        %v1628 = vmax.f32 %v1625, 0.0
        %v1629 = vld [vmem:[%s842] sm:$0xff]
        %v1630 = vld [vmem:[%s842 + $0x8] sm:$0xff]
        %v1631 = vld [vmem:[%s842 + $0x10] sm:$0xff]
        %v1632 = vld [vmem:[%s842 + $0x18] sm:$0xff]
        %v1633 = vld [vmem:[%s842 + $0x20] sm:$0xff]
        %v1634 = vld [vmem:[%s842 + $0x28] sm:$0xff]
        %v1635 = vld [vmem:[%s842 + $0x30] sm:$0xff]
        %v1636 = vld [vmem:[%s842 + $0x38] sm:$0xff]
        %v1637 = vld [vmem:[%s845] sm:$0x1]
        %v1639 = vperm.slane %v1637, 0
        %vm1641 = vcmask 523264
        %v1643 = vsel %vm1641, %v1627, 0
        %v1646 = vsel %vm1641, %v1628, 0
        %1648 = vmatpush.msra.mxu0 0.0
        %1649 = vmatpush.msra.mxu0 0.0
        %1650 = vmatpush.msra.mxu0 0.0
        %1651 = vmatpush.msra.mxu0 0.0
        %1652 = vmatpush.msra.mxu0 0.0
        %1653 = vmatpush.msra.mxu0 0.0
        %1654 = vmatpush.msra.mxu0 0.0
        %1655 = vmatpush.msra.mxu0 0.0
        %1656 = vmatpush.msra.mxu0 %v1636
        %1657 = vmatpush.msra.mxu0 %v1635
        %1658 = vmatpush.msra.mxu0 %v1634
        %1659 = vmatpush.msra.mxu0 %v1633
        %1660 = vmatpush.msra.mxu0 %v1632
        %1661 = vmatpush.msra.mxu0 %v1631
        %1662 = vmatpush.msra.mxu0 %v1630
        %1663 = vmatpush.msra.mxu0 %v1629
        %1664 = vmatmul.f32.gmra.mxu0 %v1643
        %v1665 = vpop.f32.mrf.mxu0
        %v1666 = vadd.f32 %v1639, %v1665
        %1667 = vmatmul.f32.gmra.mxu0 %v1646
        %v1668 = vpop.f32.mrf.mxu0
        %v1669 = vadd.f32 %v1639, %v1668
        %1670 = vdwg.mxu0
        %v1671 = vadd.f32 %v1666, %v1588
        %v1672 = vadd.f32 %v1669, %v1589
        %v1673 = vsel %vm873, %v1671, 0.0
        %1674 = vadd.xlane.f32.xlu0 %v1673
        %v1675 = vpop.xlane.xlu0 %1674
        %v1676 = vsel %vm873, %v1672, 0.0
        %1677 = vadd.xlane.f32.xlu0 %v1676
        %v1678 = vpop.xlane.xlu0 %1677
        %v1679 = vmul.f32 %v1675, %v1527
        %v1680 = vmul.f32 %v1678, %v1527
        %v1681 = vsub.f32 %v1671, %v1679
        %v1682 = vsub.f32 %v1672, %v1680
        %v1683 = vmul.f32 %v1681, %v1681
        %v1684 = vmul.f32 %v1682, %v1682
        %v1685 = vsel %vm873, %v1683, 0.0
        %1686 = vadd.xlane.f32.xlu0 %v1685
        %v1687 = vpop.xlane.xlu0 %1686
        %v1688 = vsel %vm873, %v1684, 0.0
        %1689 = vadd.xlane.f32.xlu0 %v1688
        %v1690 = vpop.xlane.xlu0 %1689
        %v1691 = vmul.f32 %v1687, %v1527
        %v1692 = vmul.f32 %v1690, %v1527
        %v1693 = vadd.f32 %v1691, 1e-05
        %v1694 = vadd.f32 %v1692, 1e-05
        %v1695 = vrsqrt.pop %v1693
        %v1696 = vmul.f32 %v1695, %v1693
        %v1697 = vmul.f32 %v1696, %v1695
        %v1698 = vmul.f32 0.5, %v1697
        %v1699 = vsub.f32 1.5, %v1698
        %v1700 = vmul.f32 %v1695, %v1699
        %vm1701 = vweird.f32 %v1693
        %vm1702 = vweird.f32 %v1695
        %vm1703 = vmor %vm1701, %vm1702
        %v1704 = vsel %vm1703, %v1695, %v1700
        %v1705 = vrsqrt.pop %v1694
        %v1706 = vmul.f32 %v1705, %v1694
        %v1707 = vmul.f32 %v1706, %v1705
        %v1708 = vmul.f32 0.5, %v1707
        %v1709 = vsub.f32 1.5, %v1708
        %v1710 = vmul.f32 %v1705, %v1709
        %vm1711 = vweird.f32 %v1694
        %vm1712 = vweird.f32 %v1705
        %vm1713 = vmor %vm1711, %vm1712
        %v1714 = vsel %vm1713, %v1705, %v1710
        %v1715 = vmul.f32 %v1681, %v1704
        %v1716 = vmul.f32 %v1682, %v1714
        %v1717 = vld [vmem:[%s848] sm:$0x1]
        %v1719 = vperm.slane %v1717, 0
        %v1721 = vmul.f32 %v1715, %v1719
        %v1722 = vmul.f32 %v1716, %v1719
        %v1723 = vld [vmem:[%s695] sm:$0x1]
        %v1725 = vperm.slane %v1723, 0
        %v1727 = vadd.f32 %v1721, %v1725
        %v1728 = vadd.f32 %v1722, %v1725
        %v1729 = vmul.f32 %v1727, %v1581
        %v1730 = vmul.f32 %v1728, %v1586
        %1731 = vst.msk [vmem:[#allocation2] sm:$0xff] %vm873, %v1729
        %1732 = vst.msk [vmem:[#allocation2 + $0x8] sm:$0xff] %vm873, %v1730
        %p1733 = scmp.eq.s32.totalorder %s39, 1
        // Predicated region
        $region109: #{tpu_custom_call.1} parent=87 // pred_check
          %p1734 = pneg %p1733
        $region110: #{tpu_custom_call.1} parent=87 // pred_check_branch
          %1736 = sbr.rel (%p1734) target = $region112
        $region111: #{tpu_custom_call.1} parent=87 // pred_region
          %v1737 = vld [vmem:[#allocation9] sm:$0xff]
          %v1738 = vld [vmem:[#allocation9 + $0x8] sm:$0xff]
          %v1739 = vld [vmem:[#allocation9 + $0x10] sm:$0xff]
          %v1740 = vld [vmem:[#allocation9 + $0x18] sm:$0xff]
          %v1741 = vld [vmem:[%s16] sm:$0x1]
          %v1743 = vperm.slane %v1741, 0
          %v1746 = vsel %vm873, %v1729, 0
          %v1749 = vsel %vm873, %v1730, 0
          %1751 = vmatpush.msra.mxu0 0.0
          %1752 = vmatpush.msra.mxu0 0.0
          %1753 = vmatpush.msra.mxu0 0.0
          %1754 = vmatpush.msra.mxu0 0.0
          %1755 = vmatpush.msra.mxu0 0.0
          %1756 = vmatpush.msra.mxu0 0.0
          %1757 = vmatpush.msra.mxu0 0.0
          %1758 = vmatpush.msra.mxu0 0.0
          %1759 = vmatpush.msra.mxu0 0.0
          %1760 = vmatpush.msra.mxu0 0.0
          %1761 = vmatpush.msra.mxu0 0.0
          %1762 = vmatpush.msra.mxu0 0.0
          %1763 = vmatpush.msra.mxu0 %v1740
          %1764 = vmatpush.msra.mxu0 %v1739
          %1765 = vmatpush.msra.mxu0 %v1738
          %1766 = vmatpush.msra.mxu0 %v1737
          %1767 = vmatmul.f32.gmra.mxu0 %v1746
          %v1768 = vpop.f32.mrf.mxu0
          %v1769 = vadd.f32 %v1743, %v1768
          %1770 = vmatmul.f32.gmra.mxu0 %v1749
          %v1771 = vpop.f32.mrf.mxu0
          %v1772 = vadd.f32 %v1743, %v1771
          %1773 = vdwg.mxu0
          %1774 = vst [vmem:[#allocation11] sm:$0xff] %v1769
          %1775 = vst [vmem:[#allocation11 + $0x8] sm:$0xff] %v1772
        $region112: #{tpu_custom_call.1} parent=87 // pred_fallthru
          _
        // Predicated region
        $region113: #{tpu_custom_call.1} parent=87 // pred_check
          %p1776 = pneg %p496
        $region114: #{tpu_custom_call.1} parent=87 // pred_check_branch
          %1778 = sbr.rel (%p1776) target = $region116
        $region115: #{tpu_custom_call.1} parent=87 // pred_region
          %s1779 = smul.u32 2, %s38
          %1781 = vsyncadd [#allocation5], 0
          %s1782 = smul.addr %s1779, 8
          %s1783 = scalar_lea.hbm %s17, %s1782
          %s1784 = sshll.u32 [#allocation11], 4
          %s1785 = int_to_ptr.vmem [resolvable:$true] %s1784
          %s1786 = sshll.u32 %s1783, 4
          %s1787 = int_to_ptr.hbm [resolvable:$true] %s1786
          %1792 = dma.vmem_to_hbm [thread:$0]  %s1785, 256, %s1787, [#allocation5], 128, 128, 8
        $region116: #{tpu_custom_call.1} parent=87 // pred_fallthru
          _
        // Predicated region
        $region117: #{tpu_custom_call.1} parent=87 // pred_check
          %p1793 = pneg %p496
        $region118: #{tpu_custom_call.1} parent=87 // pred_check_branch
          %1795 = sbr.rel (%p1793) target = $region120
        $region119: #{tpu_custom_call.1} parent=87 // pred_region
          %1797 = dma.done [#allocation5], 256
        $region120: #{tpu_custom_call.1} parent=87 // pred_fallthru
          _
      $region88: #{tpu_custom_call.1} parent=5 // pred_fallthru
        _
      %p1798 = scmp.le.s32.totalorder 2, %s29
      // Predicated region
      $region121: #{tpu_custom_call.1} parent=5 // pred_check
        %p1799 = pneg %p1798
      $region122: #{tpu_custom_call.1} parent=5 // pred_check_branch
        %1801 = sbr.rel (%p1799) target = $region124
      $region123: #{tpu_custom_call.1} parent=5 // pred_region
        %s1802 = ssub.s32 %s29, 2
      $region124: #{tpu_custom_call.1} parent=5 // pred_fallthru
        _
    $region6: #{tpu_custom_call.1} parent=1 // loop_footer
      %s33 = sadd.s32 1, %s29
    $region7: #{tpu_custom_call.1} parent=1 // loop_footer_branch
      %28 = sbr.rel target = $region3
    $region8: #{tpu_custom_call.1} parent=1 // loop_exit
      _
    %1803 = vsyncpa [#allocation4], 1
    %s1804 = scalar_lea.sflag [#allocation4], 1
    %1805 = vsyncpa %s1804, 1
    %1806 = vsyncpa [#allocation7], 1
    %s1807 = scalar_lea.sflag [#allocation7], 1
    %1808 = vsyncpa %s1807, 1
    %1809 = vsyncpa [#allocation10], 1
    %1810 = vsyncpa [#allocation5], 1
    %s1811 = scalar_lea.sflag [#allocation5], 1
    %1812 = vsyncpa %s1811, 1

</llo_original>
